<compile_context>
chip_gen: v5e
topology: v5e:2x2
jax: 0.10.0
libtpu: 0.0.40
codegen_flags: <defaults>
</compile_context>

<pallas_src>
import math
import functools

import jax
import jax.numpy as jnp
from jax import lax
from jax.experimental import pallas as pl
from jax.experimental.pallas import tpu as pltpu

LN_EPS = 1e-5  # torch.nn.LayerNorm default


def _layernorm(x, gamma, beta):
    # biased variance over the last dim, as torch.nn.LayerNorm does
    mu = jnp.mean(x, axis=-1, keepdims=True)
    var = jnp.mean((x - mu) ** 2, axis=-1, keepdims=True)
    return (x - mu) * lax.rsqrt(var + LN_EPS) * gamma + beta


# -----------------------------------------------------------------------------
# Fused kernel: pre_norm1 + QKV + biased softmax attention for batch row i,
# then residual against EVERY batch row j + pre_norm2 + linear1 + relu + linear2.
# Grid = (bs,) over the attention batch index i; one step does all j at once.
# -----------------------------------------------------------------------------
def encoder_kernel(x_ref, bias_ref,
                   wq_ref, bq_ref, wk_ref, bk_ref, wv_ref, bv_ref,
                   g1_ref, be1_ref, g2_ref, be2_ref,
                   w1_ref, b1_ref, w2_ref, b2_ref,
                   out_ref, *, mm_dtype):
    i = pl.program_id(0)
    bs, seq, d_model = x_ref.shape

    def mm(a, b):
        # MXU matmul with f32 accumulation.  Weights arrive pre-cast to mm_dtype from the
        # wrapper, so their astype is a trace-time no-op; only activations get cast here.
        return jnp.dot(a.astype(mm_dtype), b.astype(mm_dtype),
                       preferred_element_type=jnp.float32)

    # ---- attention for batch row i: pre_norm1 + QKV + biased softmax -------------
    xi = x_ref[i]                                           # (seq, d_model)
    xn = _layernorm(xi, g1_ref[...], be1_ref[...])          # pre_norm1
    q = mm(xn, wq_ref[...]) + bq_ref[...]                   # 1/sqrt(head_dim) folded into Wq/bq
    k = mm(xn, wk_ref[...]) + bk_ref[...]
    v = mm(xn, wv_ref[...]) + bv_ref[...]
    # q @ k^T by contracting the last dims: the MXU consumes the transposed operand directly
    # (no XLU transpose of k).  If bundle dumps ever show a vxpose here, switch to
    # pl.dot(q, k, trans_b=True).
    logits = lax.dot_general(q.astype(mm_dtype), k.astype(mm_dtype),
                             (((1,), (1,)), ((), ())),
                             preferred_element_type=jnp.float32)
    logits = logits + bias_ref[0, 0]                        # (seq, seq); n_head == 1
    m = jnp.max(logits, axis=-1, keepdims=True)
    p = jnp.exp(logits - m)
    inv = pl.reciprocal(jnp.sum(p, axis=-1, keepdims=True), approx=True)   # EUP slot
    attn = mm(p * inv, v)                                   # (seq, d_model)

    # ---- residual against every batch row j + pre_norm2 + FFN --------------------
    # PyTorch's `x + res` broadcast: out[i, j] = FFN(LN2(attn(x[i]) + x[j])).
    # All bs residual rows in one step -> FFN matmuls get M = bs*seq rows.
    # nn.Dropout is identity in eval mode.
    z = x_ref[...] + attn[None, :, :]                       # (bs, seq, d_model)
    zn = _layernorm(z, g2_ref[...], be2_ref[...])           # pre_norm2
    zn = zn.reshape(bs * seq, d_model)                      # leading-dim collapse (layout no-op
                                                            # when seq is a multiple of 8)
    h = jnp.maximum(mm(zn, w1_ref[...]) + b1_ref[...], 0.0)  # linear1 + relu
    o = mm(h, w2_ref[...]) + b2_ref[...]                    # linear2, (bs*seq, d_model)

    if out_ref.shape[-1] == d_model:
        # d_model is a multiple of 128 -> the store is already lane-dense.
        out_ref[0] = o.reshape(bs, seq, d_model)
    else:
        # Lane-sparse d_model: store a flattened (seq*d_model)-lane slab instead of
        # masked partial stores; the wrapper reshapes it back (free).
        out_ref[0] = o.reshape(bs, seq * d_model)


# -----------------------------------------------------------------------------
# Wrapper
# -----------------------------------------------------------------------------
def encoder_layer_forward(x, bias, params, n_head, *, mm_dtype=jnp.float32):
    bs, seq, d_model = x.shape
    head_dim = d_model // n_head
    # PyTorch's residual add broadcasts (bs, n_head, seq, head_dim) + (bs, seq, d_model);
    # this is only shape-valid when head_dim == d_model, i.e. n_head == 1.
    assert n_head == 1 and head_dim == d_model, (
        "Encoder_Layer's residual broadcast requires n_head == 1 (as in the PyTorch module)")

    # Fold the softmax scale into the Q projection (free at kernel time) and cast the matmul
    # weights to mm_dtype ONCE here (not per grid step inside the kernel).
    scale = 1.0 / math.sqrt(head_dim)
    wq = (params["wq"] * scale).astype(mm_dtype)
    bq = params["bq"] * scale                               # added post-matmul in f32
    wk = params["wk"].astype(mm_dtype)
    wv = params["wv"].astype(mm_dtype)
    w1 = params["w1"].astype(mm_dtype)
    w2 = params["w2"].astype(mm_dtype)
    operands = (x, bias,
                wq, bq, wk, params["bk"], wv, params["bv"],
                params["g1"], params["be1"], params["g2"], params["be2"],
                w1, params["b1"], w2, params["b2"])

    lane_dense = (d_model % 128 == 0)
    if lane_dense:
        out_shape = jax.ShapeDtypeStruct((bs, bs, seq, d_model), jnp.float32)
        out_spec = pl.BlockSpec((1, bs, seq, d_model), lambda i: (i, 0, 0, 0))
    else:
        out_shape = jax.ShapeDtypeStruct((bs, bs, seq * d_model), jnp.float32)
        out_spec = pl.BlockSpec((1, bs, seq * d_model), lambda i: (i, 0, 0))

    kernel = functools.partial(encoder_kernel, mm_dtype=mm_dtype)

    def build(single_buffer_invariants):
        # Loop-invariant operands: constant index map (fetched once, kept resident).
        # Single-buffering them halves their VMEM footprint (matters most on v7x's 64 MiB).
        inv = (dict(pipeline_mode=pl.Buffered(buffer_count=1))
               if single_buffer_invariants else {})
        w_spec = pl.BlockSpec((d_model, d_model), lambda i: (0, 0), **inv)
        v_spec = pl.BlockSpec((1, d_model), lambda i: (0, 0), **inv)
        x_spec = pl.BlockSpec((bs, seq, d_model), lambda i: (0, 0, 0), **inv)
        bias_spec = pl.BlockSpec((1, n_head, seq, seq), lambda i: (i, 0, 0, 0))
        return pl.pallas_call(
            kernel,
            out_shape=out_shape,
            grid=(bs,),
            in_specs=[
                x_spec,            # x (resident; attention row picked with program_id)
                bias_spec,         # attention bias for row i
                w_spec, v_spec,    # Wq (pre-scaled), bq (pre-scaled)
                w_spec, v_spec,    # Wk, bk
                w_spec, v_spec,    # Wv, bv
                v_spec, v_spec,    # ln1 gamma, beta
                v_spec, v_spec,    # ln2 gamma, beta
                w_spec, v_spec,    # W1, b1
                w_spec, v_spec,    # W2, b2
            ],
            out_specs=out_spec,
            compiler_params=pltpu.CompilerParams(
                # 2 parallel iterations -> both v7x TensorCores busy; no-op on v5e/v6e.
                dimension_semantics=("parallel",),
                # 48 MiB fits every generation (v7x physical VMEM is 64 MiB); raise toward
                # ~96 MiB on v6e at production shapes for larger tiles.
                vmem_limit_bytes=48 * 1024 * 1024,
            ),
        )

    try:
        out = build(True)(*operands)
    except Exception:
        # pipeline_mode=pl.Buffered(1) is a VMEM-footprint optimization only; fall back to
        # default double buffering on jax versions that reject it.  Any unrelated failure
        # re-raises from the fallback path below.
        out = build(False)(*operands)

    if not lane_dense:
        out = out.reshape(bs, bs, seq, d_model)
    return out


# -----------------------------------------------------------------------------
# Deterministic parameter init (synthetic, mimics torch.nn.Linear uniform init)
# -----------------------------------------------------------------------------
def init_params(key, d_model):
    ks = jax.random.split(key, 10)
    bound = 1.0 / math.sqrt(d_model)

    def lin(kw, kb):
        w = jax.random.uniform(kw, (d_model, d_model), jnp.float32, -bound, bound)
        b = jax.random.uniform(kb, (1, d_model), jnp.float32, -bound, bound)
        return w, b

    wq, bq = lin(ks[0], ks[1])
    wk, bk = lin(ks[2], ks[3])
    wv, bv = lin(ks[4], ks[5])
    w1, b1 = lin(ks[6], ks[7])
    w2, b2 = lin(ks[8], ks[9])
    ones = jnp.ones((1, d_model), jnp.float32)
    zeros = jnp.zeros((1, d_model), jnp.float32)
    return dict(wq=wq, bq=bq, wk=wk, bk=bk, wv=wv, bv=bv,
                w1=w1, b1=b1, w2=w2, b2=b2,
                g1=ones, be1=zeros, g2=ones, be2=zeros)


# -----------------------------------------------------------------------------
# Pure-JAX reference (mirrors the PyTorch forward exactly) for validation
# -----------------------------------------------------------------------------
def reference(x, bias, p, n_head):
    bs, seq, d = x.shape
    hd = d // n_head
    xn = _layernorm(x, p["g1"][0], p["be1"][0])
    q = (xn @ p["wq"] + p["bq"]).reshape(bs, seq, n_head, hd).transpose(0, 2, 1, 3)
    k = (xn @ p["wk"] + p["bk"]).reshape(bs, seq, n_head, hd).transpose(0, 2, 1, 3)
    v = (xn @ p["wv"] + p["bv"]).reshape(bs, seq, n_head, hd).transpose(0, 2, 1, 3)
    logits = jnp.einsum("bhqd,bhkd->bhqk", q, k) / math.sqrt(hd) + bias
    w = jax.nn.softmax(logits, axis=-1)
    attn = jnp.einsum("bhqk,bhkd->bhqd", w, v)
    z = attn + x                                    # PyTorch-style broadcast
    zn = _layernorm(z, p["g2"][0], p["be2"][0])
    h = jnp.maximum(zn @ p["w1"] + p["b1"], 0.0)
    return h @ p["w2"] + p["b2"]


if __name__ == "__main__":
    # n_head=1 is required for the module's residual broadcast to be shape-valid;
    # d_model=128 keeps every matmul dim and the output store lane-dense (multiple of 128).
    bs, seq, d_model, n_head = 2, 8, 128, 1
    key = jax.random.PRNGKey(0)
    kx, kb, kp = jax.random.split(key, 3)
    x = jax.random.normal(kx, (bs, seq, d_model), jnp.float32)
    bias = 0.1 * jax.random.normal(kb, (bs, n_head, seq, seq), jnp.float32)
    params = init_params(kp, d_model)

    out = encoder_layer_forward(x, bias, params, n_head)   # mm_dtype=f32 for the 1e-3 check
    out = jax.block_until_ready(out)

    ref = reference(x, bias, params, n_head)
    assert out.shape == ref.shape, (out.shape, ref.shape)
    max_err = float(jnp.max(jnp.abs(out - ref)))
    # pl.reciprocal(approx=True) in the softmax denominator has ~2^-12 relative error;
    # everything else is f32 (use mm_dtype=jnp.bfloat16 for production and loosen tolerance).
    assert max_err < 1e-3, max_err
    print("KERNEL_OK")
</pallas_src>

<mosaic_0001>
module attributes {stable_mosaic.version = 11 : i64} {
  func.func @encoder_kernel(%arg0: i32, %arg1: memref<2x8x128xf32, #tpu.memory_space<vmem>>, %arg2: memref<1x1x8x8xf32, #tpu.memory_space<vmem>>, %arg3: memref<128x128xf32, #tpu.memory_space<vmem>>, %arg4: memref<1x128xf32, #tpu.memory_space<vmem>>, %arg5: memref<128x128xf32, #tpu.memory_space<vmem>>, %arg6: memref<1x128xf32, #tpu.memory_space<vmem>>, %arg7: memref<128x128xf32, #tpu.memory_space<vmem>>, %arg8: memref<1x128xf32, #tpu.memory_space<vmem>>, %arg9: memref<1x128xf32, #tpu.memory_space<vmem>>, %arg10: memref<1x128xf32, #tpu.memory_space<vmem>>, %arg11: memref<1x128xf32, #tpu.memory_space<vmem>>, %arg12: memref<1x128xf32, #tpu.memory_space<vmem>>, %arg13: memref<128x128xf32, #tpu.memory_space<vmem>>, %arg14: memref<1x128xf32, #tpu.memory_space<vmem>>, %arg15: memref<128x128xf32, #tpu.memory_space<vmem>>, %arg16: memref<1x128xf32, #tpu.memory_space<vmem>>, %arg17: memref<1x2x8x128xf32, #tpu.memory_space<vmem>>) attributes {dimension_semantics = [#tpu.dimension_semantics<parallel>], iteration_bounds = array<i64: 2>, scalar_prefetch = 0 : i64, scratch_operands = 0 : i64, tpu.core_type = #tpu.core_type<tc>, window_params = [{pipeline_mode = #tpu.pipeline_mode<synchronous>, transform_indices = @transform_0, window_bounds = array<i64: 2, 8, 128>}, {transform_indices = @transform_1, window_bounds = array<i64: 1, 1, 8, 8>}, {pipeline_mode = #tpu.pipeline_mode<synchronous>, transform_indices = @transform_2, window_bounds = array<i64: 128, 128>}, {pipeline_mode = #tpu.pipeline_mode<synchronous>, transform_indices = @transform_3, window_bounds = array<i64: 1, 128>}, {pipeline_mode = #tpu.pipeline_mode<synchronous>, transform_indices = @transform_4, window_bounds = array<i64: 128, 128>}, {pipeline_mode = #tpu.pipeline_mode<synchronous>, transform_indices = @transform_5, window_bounds = array<i64: 1, 128>}, {pipeline_mode = #tpu.pipeline_mode<synchronous>, transform_indices = @transform_6, window_bounds = array<i64: 128, 128>}, {pipeline_mode = #tpu.pipeline_mode<synchronous>, transform_indices = @transform_7, window_bounds = array<i64: 1, 128>}, {pipeline_mode = #tpu.pipeline_mode<synchronous>, transform_indices = @transform_8, window_bounds = array<i64: 1, 128>}, {pipeline_mode = #tpu.pipeline_mode<synchronous>, transform_indices = @transform_9, window_bounds = array<i64: 1, 128>}, {pipeline_mode = #tpu.pipeline_mode<synchronous>, transform_indices = @transform_10, window_bounds = array<i64: 1, 128>}, {pipeline_mode = #tpu.pipeline_mode<synchronous>, transform_indices = @transform_11, window_bounds = array<i64: 1, 128>}, {pipeline_mode = #tpu.pipeline_mode<synchronous>, transform_indices = @transform_12, window_bounds = array<i64: 128, 128>}, {pipeline_mode = #tpu.pipeline_mode<synchronous>, transform_indices = @transform_13, window_bounds = array<i64: 1, 128>}, {pipeline_mode = #tpu.pipeline_mode<synchronous>, transform_indices = @transform_14, window_bounds = array<i64: 128, 128>}, {pipeline_mode = #tpu.pipeline_mode<synchronous>, transform_indices = @transform_15, window_bounds = array<i64: 1, 128>}, {transform_indices = @transform_16, window_bounds = array<i64: 1, 2, 8, 128>}]} {
    %0 = arith.index_cast %arg0 : i32 to index
    %c0 = arith.constant 0 : index
    %c0_0 = arith.constant 0 : index
    %1 = vector.load %arg1[%0, %c0, %c0_0] : memref<2x8x128xf32, #tpu.memory_space<vmem>>, vector<1x8x128xf32>
    %2 = vector.shape_cast %1 : vector<1x8x128xf32> to vector<8x128xf32>
    %c0_1 = arith.constant 0 : index
    %c0_2 = arith.constant 0 : index
    %3 = vector.load %arg9[%c0_1, %c0_2] : memref<1x128xf32, #tpu.memory_space<vmem>>, vector<1x128xf32>
    %c0_3 = arith.constant 0 : index
    %c0_4 = arith.constant 0 : index
    %4 = vector.load %arg10[%c0_3, %c0_4] : memref<1x128xf32, #tpu.memory_space<vmem>>, vector<1x128xf32>
    %cst = arith.constant dense<0.000000e+00> : vector<8xf32>
    %5 = vector.multi_reduction <add>, %2, %cst [1] : vector<8x128xf32> to vector<8xf32>
    %6 = vector.shape_cast %5 : vector<8xf32> to vector<8x1xf32>
    %cst_5 = arith.constant 1.280000e+02 : f32
    %7 = vector.broadcast %cst_5 : f32 to vector<8x1xf32>
    %8 = arith.divf %6, %7 : vector<8x1xf32>
    %9 = vector.broadcast %8 : vector<8x1xf32> to vector<8x128xf32>
    %10 = arith.subf %2, %9 : vector<8x128xf32>
    %11 = arith.mulf %10, %10 : vector<8x128xf32>
    %cst_6 = arith.constant dense<0.000000e+00> : vector<8xf32>
    %12 = vector.multi_reduction <add>, %11, %cst_6 [1] : vector<8x128xf32> to vector<8xf32>
    %13 = vector.shape_cast %12 : vector<8xf32> to vector<8x1xf32>
    %cst_7 = arith.constant 1.280000e+02 : f32
    %14 = vector.broadcast %cst_7 : f32 to vector<8x1xf32>
    %15 = arith.divf %13, %14 : vector<8x1xf32>
    %16 = vector.broadcast %8 : vector<8x1xf32> to vector<8x128xf32>
    %17 = arith.subf %2, %16 : vector<8x128xf32>
    %cst_8 = arith.constant 9.99999974E-6 : f32
    %18 = vector.broadcast %cst_8 : f32 to vector<8x1xf32>
    %19 = arith.addf %15, %18 : vector<8x1xf32>
    %20 = math.rsqrt %19 : vector<8x1xf32>
    %21 = vector.broadcast %20 : vector<8x1xf32> to vector<8x128xf32>
    %22 = arith.mulf %17, %21 : vector<8x128xf32>
    %23 = vector.broadcast %3 : vector<1x128xf32> to vector<8x128xf32>
    %24 = arith.mulf %22, %23 : vector<8x128xf32>
    %25 = vector.broadcast %4 : vector<1x128xf32> to vector<8x128xf32>
    %26 = arith.addf %24, %25 : vector<8x128xf32>
    %c0_9 = arith.constant 0 : index
    %c0_10 = arith.constant 0 : index
    %27 = vector.load %arg3[%c0_9, %c0_10] : memref<128x128xf32, #tpu.memory_space<vmem>>, vector<128x128xf32>
    %cst_11 = arith.constant dense<0.000000e+00> : vector<8x128xf32>
    %28 = tpu.matmul %26, %27, %cst_11 {dimension_numbers = #tpu.dot_dimension_numbers<[1], [0], [0], [1], [0, 0, 1, 1], [], []>} : vector<8x128xf32>, vector<128x128xf32>, vector<8x128xf32> -> vector<8x128xf32>
    %c0_12 = arith.constant 0 : index
    %c0_13 = arith.constant 0 : index
    %29 = vector.load %arg4[%c0_12, %c0_13] : memref<1x128xf32, #tpu.memory_space<vmem>>, vector<1x128xf32>
    %30 = vector.broadcast %29 : vector<1x128xf32> to vector<8x128xf32>
    %31 = arith.addf %28, %30 : vector<8x128xf32>
    %c0_14 = arith.constant 0 : index
    %c0_15 = arith.constant 0 : index
    %32 = vector.load %arg5[%c0_14, %c0_15] : memref<128x128xf32, #tpu.memory_space<vmem>>, vector<128x128xf32>
    %cst_16 = arith.constant dense<0.000000e+00> : vector<8x128xf32>
    %33 = tpu.matmul %26, %32, %cst_16 {dimension_numbers = #tpu.dot_dimension_numbers<[1], [0], [0], [1], [0, 0, 1, 1], [], []>} : vector<8x128xf32>, vector<128x128xf32>, vector<8x128xf32> -> vector<8x128xf32>
    %c0_17 = arith.constant 0 : index
    %c0_18 = arith.constant 0 : index
    %34 = vector.load %arg6[%c0_17, %c0_18] : memref<1x128xf32, #tpu.memory_space<vmem>>, vector<1x128xf32>
    %35 = vector.broadcast %34 : vector<1x128xf32> to vector<8x128xf32>
    %36 = arith.addf %33, %35 : vector<8x128xf32>
    %c0_19 = arith.constant 0 : index
    %c0_20 = arith.constant 0 : index
    %37 = vector.load %arg7[%c0_19, %c0_20] : memref<128x128xf32, #tpu.memory_space<vmem>>, vector<128x128xf32>
    %cst_21 = arith.constant dense<0.000000e+00> : vector<8x128xf32>
    %38 = tpu.matmul %26, %37, %cst_21 {dimension_numbers = #tpu.dot_dimension_numbers<[1], [0], [0], [1], [0, 0, 1, 1], [], []>} : vector<8x128xf32>, vector<128x128xf32>, vector<8x128xf32> -> vector<8x128xf32>
    %c0_22 = arith.constant 0 : index
    %c0_23 = arith.constant 0 : index
    %39 = vector.load %arg8[%c0_22, %c0_23] : memref<1x128xf32, #tpu.memory_space<vmem>>, vector<1x128xf32>
    %40 = vector.broadcast %39 : vector<1x128xf32> to vector<8x128xf32>
    %41 = arith.addf %38, %40 : vector<8x128xf32>
    %cst_24 = arith.constant dense<0.000000e+00> : vector<8x8xf32>
    %42 = tpu.matmul %31, %36, %cst_24 {dimension_numbers = #tpu.dot_dimension_numbers<[1], [1], [0], [0], [0, 0, 1, 0], [], []>} : vector<8x128xf32>, vector<8x128xf32>, vector<8x8xf32> -> vector<8x8xf32>
    %c0_25 = arith.constant 0 : index
    %c0_26 = arith.constant 0 : index
    %c0_27 = arith.constant 0 : index
    %c0_28 = arith.constant 0 : index
    %43 = vector.load %arg2[%c0_25, %c0_26, %c0_27, %c0_28] : memref<1x1x8x8xf32, #tpu.memory_space<vmem>>, vector<1x1x8x8xf32>
    %44 = vector.shape_cast %43 : vector<1x1x8x8xf32> to vector<8x8xf32>
    %45 = arith.addf %42, %44 : vector<8x8xf32>
    %cst_29 = arith.constant dense<0xFF800000> : vector<8xf32>
    %46 = vector.multi_reduction <maximumf>, %45, %cst_29 [1] : vector<8x8xf32> to vector<8xf32>
    %47 = vector.shape_cast %46 : vector<8xf32> to vector<8x1xf32>
    %48 = vector.broadcast %47 : vector<8x1xf32> to vector<8x8xf32>
    %49 = arith.subf %45, %48 : vector<8x8xf32>
    %50 = math.exp %49 : vector<8x8xf32>
    %cst_30 = arith.constant dense<0.000000e+00> : vector<8xf32>
    %51 = vector.multi_reduction <add>, %50, %cst_30 [1] : vector<8x8xf32> to vector<8xf32>
    %52 = vector.shape_cast %51 : vector<8xf32> to vector<8x1xf32>
    %53 = tpu.reciprocal %52 {approx = true} : vector<8x1xf32> -> vector<8x1xf32>
    %54 = vector.broadcast %53 : vector<8x1xf32> to vector<8x8xf32>
    %55 = arith.mulf %50, %54 : vector<8x8xf32>
    %cst_31 = arith.constant dense<0.000000e+00> : vector<8x128xf32>
    %56 = tpu.matmul %55, %41, %cst_31 {dimension_numbers = #tpu.dot_dimension_numbers<[1], [0], [0], [1], [0, 0, 1, 1], [], []>} : vector<8x8xf32>, vector<8x128xf32>, vector<8x128xf32> -> vector<8x128xf32>
    %c0_32 = arith.constant 0 : index
    %c0_33 = arith.constant 0 : index
    %c0_34 = arith.constant 0 : index
    %57 = vector.load %arg1[%c0_32, %c0_33, %c0_34] : memref<2x8x128xf32, #tpu.memory_space<vmem>>, vector<2x8x128xf32>
    %58 = vector.shape_cast %56 : vector<8x128xf32> to vector<1x8x128xf32>
    %59 = vector.broadcast %58 : vector<1x8x128xf32> to vector<2x8x128xf32>
    %60 = arith.addf %57, %59 : vector<2x8x128xf32>
    %c0_35 = arith.constant 0 : index
    %c0_36 = arith.constant 0 : index
    %61 = vector.load %arg11[%c0_35, %c0_36] : memref<1x128xf32, #tpu.memory_space<vmem>>, vector<1x128xf32>
    %c0_37 = arith.constant 0 : index
    %c0_38 = arith.constant 0 : index
    %62 = vector.load %arg12[%c0_37, %c0_38] : memref<1x128xf32, #tpu.memory_space<vmem>>, vector<1x128xf32>
    %cst_39 = arith.constant dense<0.000000e+00> : vector<2x8xf32>
    %63 = vector.multi_reduction <add>, %60, %cst_39 [2] : vector<2x8x128xf32> to vector<2x8xf32>
    %64 = vector.shape_cast %63 : vector<2x8xf32> to vector<2x8x1xf32>
    %cst_40 = arith.constant 1.280000e+02 : f32
    %65 = vector.broadcast %cst_40 : f32 to vector<2x8x1xf32>
    %66 = arith.divf %64, %65 : vector<2x8x1xf32>
    %67 = vector.broadcast %66 : vector<2x8x1xf32> to vector<2x8x128xf32>
    %68 = arith.subf %60, %67 : vector<2x8x128xf32>
    %69 = arith.mulf %68, %68 : vector<2x8x128xf32>
    %cst_41 = arith.constant dense<0.000000e+00> : vector<2x8xf32>
    %70 = vector.multi_reduction <add>, %69, %cst_41 [2] : vector<2x8x128xf32> to vector<2x8xf32>
    %71 = vector.shape_cast %70 : vector<2x8xf32> to vector<2x8x1xf32>
    %cst_42 = arith.constant 1.280000e+02 : f32
    %72 = vector.broadcast %cst_42 : f32 to vector<2x8x1xf32>
    %73 = arith.divf %71, %72 : vector<2x8x1xf32>
    %74 = vector.broadcast %66 : vector<2x8x1xf32> to vector<2x8x128xf32>
    %75 = arith.subf %60, %74 : vector<2x8x128xf32>
    %cst_43 = arith.constant 9.99999974E-6 : f32
    %76 = vector.broadcast %cst_43 : f32 to vector<2x8x1xf32>
    %77 = arith.addf %73, %76 : vector<2x8x1xf32>
    %78 = math.rsqrt %77 : vector<2x8x1xf32>
    %79 = vector.broadcast %78 : vector<2x8x1xf32> to vector<2x8x128xf32>
    %80 = arith.mulf %75, %79 : vector<2x8x128xf32>
    %81 = vector.shape_cast %61 : vector<1x128xf32> to vector<1x1x128xf32>
    %82 = vector.broadcast %81 : vector<1x1x128xf32> to vector<2x8x128xf32>
    %83 = arith.mulf %80, %82 : vector<2x8x128xf32>
    %84 = vector.shape_cast %62 : vector<1x128xf32> to vector<1x1x128xf32>
    %85 = vector.broadcast %84 : vector<1x1x128xf32> to vector<2x8x128xf32>
    %86 = arith.addf %83, %85 : vector<2x8x128xf32>
    %87 = vector.shape_cast %86 : vector<2x8x128xf32> to vector<16x128xf32>
    %c0_44 = arith.constant 0 : index
    %c0_45 = arith.constant 0 : index
    %88 = vector.load %arg13[%c0_44, %c0_45] : memref<128x128xf32, #tpu.memory_space<vmem>>, vector<128x128xf32>
    %cst_46 = arith.constant dense<0.000000e+00> : vector<16x128xf32>
    %89 = tpu.matmul %87, %88, %cst_46 {dimension_numbers = #tpu.dot_dimension_numbers<[1], [0], [0], [1], [0, 0, 1, 1], [], []>} : vector<16x128xf32>, vector<128x128xf32>, vector<16x128xf32> -> vector<16x128xf32>
    %c0_47 = arith.constant 0 : index
    %c0_48 = arith.constant 0 : index
    %90 = vector.load %arg14[%c0_47, %c0_48] : memref<1x128xf32, #tpu.memory_space<vmem>>, vector<1x128xf32>
    %91 = vector.broadcast %90 : vector<1x128xf32> to vector<16x128xf32>
    %92 = arith.addf %89, %91 : vector<16x128xf32>
    %cst_49 = arith.constant 0.000000e+00 : f32
    %93 = vector.broadcast %cst_49 : f32 to vector<16x128xf32>
    %94 = arith.maximumf %92, %93 : vector<16x128xf32>
    %c0_50 = arith.constant 0 : index
    %c0_51 = arith.constant 0 : index
    %95 = vector.load %arg15[%c0_50, %c0_51] : memref<128x128xf32, #tpu.memory_space<vmem>>, vector<128x128xf32>
    %cst_52 = arith.constant dense<0.000000e+00> : vector<16x128xf32>
    %96 = tpu.matmul %94, %95, %cst_52 {dimension_numbers = #tpu.dot_dimension_numbers<[1], [0], [0], [1], [0, 0, 1, 1], [], []>} : vector<16x128xf32>, vector<128x128xf32>, vector<16x128xf32> -> vector<16x128xf32>
    %c0_53 = arith.constant 0 : index
    %c0_54 = arith.constant 0 : index
    %97 = vector.load %arg16[%c0_53, %c0_54] : memref<1x128xf32, #tpu.memory_space<vmem>>, vector<1x128xf32>
    %98 = vector.broadcast %97 : vector<1x128xf32> to vector<16x128xf32>
    %99 = arith.addf %96, %98 : vector<16x128xf32>
    %100 = vector.shape_cast %99 : vector<16x128xf32> to vector<2x8x128xf32>
    %c0_55 = arith.constant 0 : index
    %c0_56 = arith.constant 0 : index
    %c0_57 = arith.constant 0 : index
    %c0_58 = arith.constant 0 : index
    %101 = vector.load %arg17[%c0_55, %c0_56, %c0_57, %c0_58] : memref<1x2x8x128xf32, #tpu.memory_space<vmem>>, vector<1x2x8x128xf32>
    %102 = vector.shape_cast %101 : vector<1x2x8x128xf32> to vector<2x8x128xf32>
    %103 = vector.shape_cast %100 : vector<2x8x128xf32> to vector<1x2x8x128xf32>
    tpu.vector_store %arg17[%c0_55, %c0_56, %c0_57, %c0_58], %103 {strides = array<i32>} : memref<1x2x8x128xf32, #tpu.memory_space<vmem>>, vector<1x2x8x128xf32>,
    return
  }
  func.func @transform_0(%arg0: i32) -> (i32, i32, i32) {
    %c0_i32 = arith.constant 0 : i32
    %c0_i32_0 = arith.constant 0 : i32
    %c0_i32_1 = arith.constant 0 : i32
    %c0_i32_2 = arith.constant 0 : i32
    return %c0_i32, %c0_i32_0, %c0_i32_1 : i32, i32, i32
  }
  func.func @transform_1(%arg0: i32) -> (i32, i32, i32, i32) {
    %c0_i32 = arith.constant 0 : i32
    %c0_i32_0 = arith.constant 0 : i32
    %c0_i32_1 = arith.constant 0 : i32
    %c0_i32_2 = arith.constant 0 : i32
    return %arg0, %c0_i32, %c0_i32_0, %c0_i32_1 : i32, i32, i32, i32
  }
  func.func @transform_2(%arg0: i32) -> (i32, i32) {
    %c0_i32 = arith.constant 0 : i32
    %c0_i32_0 = arith.constant 0 : i32
    %c0_i32_1 = arith.constant 0 : i32
    return %c0_i32, %c0_i32_0 : i32, i32
  }
  func.func @transform_3(%arg0: i32) -> (i32, i32) {
    %c0_i32 = arith.constant 0 : i32
    %c0_i32_0 = arith.constant 0 : i32
    %c0_i32_1 = arith.constant 0 : i32
    return %c0_i32, %c0_i32_0 : i32, i32
  }
  func.func @transform_4(%arg0: i32) -> (i32, i32) {
    %c0_i32 = arith.constant 0 : i32
    %c0_i32_0 = arith.constant 0 : i32
    %c0_i32_1 = arith.constant 0 : i32
    return %c0_i32, %c0_i32_0 : i32, i32
  }
  func.func @transform_5(%arg0: i32) -> (i32, i32) {
    %c0_i32 = arith.constant 0 : i32
    %c0_i32_0 = arith.constant 0 : i32
    %c0_i32_1 = arith.constant 0 : i32
    return %c0_i32, %c0_i32_0 : i32, i32
  }
  func.func @transform_6(%arg0: i32) -> (i32, i32) {
    %c0_i32 = arith.constant 0 : i32
    %c0_i32_0 = arith.constant 0 : i32
    %c0_i32_1 = arith.constant 0 : i32
    return %c0_i32, %c0_i32_0 : i32, i32
  }
  func.func @transform_7(%arg0: i32) -> (i32, i32) {
    %c0_i32 = arith.constant 0 : i32
    %c0_i32_0 = arith.constant 0 : i32
    %c0_i32_1 = arith.constant 0 : i32
    return %c0_i32, %c0_i32_0 : i32, i32
  }
  func.func @transform_8(%arg0: i32) -> (i32, i32) {
    %c0_i32 = arith.constant 0 : i32
    %c0_i32_0 = arith.constant 0 : i32
    %c0_i32_1 = arith.constant 0 : i32
    return %c0_i32, %c0_i32_0 : i32, i32
  }
  func.func @transform_9(%arg0: i32) -> (i32, i32) {
    %c0_i32 = arith.constant 0 : i32
    %c0_i32_0 = arith.constant 0 : i32
    %c0_i32_1 = arith.constant 0 : i32
    return %c0_i32, %c0_i32_0 : i32, i32
  }
  func.func @transform_10(%arg0: i32) -> (i32, i32) {
    %c0_i32 = arith.constant 0 : i32
    %c0_i32_0 = arith.constant 0 : i32
    %c0_i32_1 = arith.constant 0 : i32
    return %c0_i32, %c0_i32_0 : i32, i32
  }
  func.func @transform_11(%arg0: i32) -> (i32, i32) {
    %c0_i32 = arith.constant 0 : i32
    %c0_i32_0 = arith.constant 0 : i32
    %c0_i32_1 = arith.constant 0 : i32
    return %c0_i32, %c0_i32_0 : i32, i32
  }
  func.func @transform_12(%arg0: i32) -> (i32, i32) {
    %c0_i32 = arith.constant 0 : i32
    %c0_i32_0 = arith.constant 0 : i32
    %c0_i32_1 = arith.constant 0 : i32
    return %c0_i32, %c0_i32_0 : i32, i32
  }
  func.func @transform_13(%arg0: i32) -> (i32, i32) {
    %c0_i32 = arith.constant 0 : i32
    %c0_i32_0 = arith.constant 0 : i32
    %c0_i32_1 = arith.constant 0 : i32
    return %c0_i32, %c0_i32_0 : i32, i32
  }
  func.func @transform_14(%arg0: i32) -> (i32, i32) {
    %c0_i32 = arith.constant 0 : i32
    %c0_i32_0 = arith.constant 0 : i32
    %c0_i32_1 = arith.constant 0 : i32
    return %c0_i32, %c0_i32_0 : i32, i32
  }
  func.func @transform_15(%arg0: i32) -> (i32, i32) {
    %c0_i32 = arith.constant 0 : i32
    %c0_i32_0 = arith.constant 0 : i32
    %c0_i32_1 = arith.constant 0 : i32
    return %c0_i32, %c0_i32_0 : i32, i32
  }
  func.func @transform_16(%arg0: i32) -> (i32, i32, i32, i32) {
    %c0_i32 = arith.constant 0 : i32
    %c0_i32_0 = arith.constant 0 : i32
    %c0_i32_1 = arith.constant 0 : i32
    %c0_i32_2 = arith.constant 0 : i32
    return %arg0, %c0_i32, %c0_i32_0, %c0_i32_1 : i32, i32, i32, i32
  }
}

module attributes {stable_mosaic.version = 11 : i64} {
  func.func @encoder_kernel(%arg0: i32, %arg1: memref<2x8x128xf32, #tpu.memory_space<vmem>>, %arg2: memref<1x1x8x8xf32, #tpu.memory_space<vmem>>, %arg3: memref<128x128xf32, #tpu.memory_space<vmem>>, %arg4: memref<1x128xf32, #tpu.memory_space<vmem>>, %arg5: memref<128x128xf32, #tpu.memory_space<vmem>>, %arg6: memref<1x128xf32, #tpu.memory_space<vmem>>, %arg7: memref<128x128xf32, #tpu.memory_space<vmem>>, %arg8: memref<1x128xf32, #tpu.memory_space<vmem>>, %arg9: memref<1x128xf32, #tpu.memory_space<vmem>>, %arg10: memref<1x128xf32, #tpu.memory_space<vmem>>, %arg11: memref<1x128xf32, #tpu.memory_space<vmem>>, %arg12: memref<1x128xf32, #tpu.memory_space<vmem>>, %arg13: memref<128x128xf32, #tpu.memory_space<vmem>>, %arg14: memref<1x128xf32, #tpu.memory_space<vmem>>, %arg15: memref<128x128xf32, #tpu.memory_space<vmem>>, %arg16: memref<1x128xf32, #tpu.memory_space<vmem>>, %arg17: memref<1x2x8x128xf32, #tpu.memory_space<vmem>>) attributes {dimension_semantics = [#tpu.dimension_semantics<parallel>], iteration_bounds = array<i64: 2>, scalar_prefetch = 0 : i64, scratch_operands = 0 : i64, tpu.core_type = #tpu.core_type<tc>, window_params = [{pipeline_mode = #tpu.pipeline_mode<synchronous>, transform_indices = @transform_0, window_bounds = array<i64: 2, 8, 128>}, {transform_indices = @transform_1, window_bounds = array<i64: 1, 1, 8, 8>}, {pipeline_mode = #tpu.pipeline_mode<synchronous>, transform_indices = @transform_2, window_bounds = array<i64: 128, 128>}, {pipeline_mode = #tpu.pipeline_mode<synchronous>, transform_indices = @transform_3, window_bounds = array<i64: 1, 128>}, {pipeline_mode = #tpu.pipeline_mode<synchronous>, transform_indices = @transform_4, window_bounds = array<i64: 128, 128>}, {pipeline_mode = #tpu.pipeline_mode<synchronous>, transform_indices = @transform_5, window_bounds = array<i64: 1, 128>}, {pipeline_mode = #tpu.pipeline_mode<synchronous>, transform_indices = @transform_6, window_bounds = array<i64: 128, 128>}, {pipeline_mode = #tpu.pipeline_mode<synchronous>, transform_indices = @transform_7, window_bounds = array<i64: 1, 128>}, {pipeline_mode = #tpu.pipeline_mode<synchronous>, transform_indices = @transform_8, window_bounds = array<i64: 1, 128>}, {pipeline_mode = #tpu.pipeline_mode<synchronous>, transform_indices = @transform_9, window_bounds = array<i64: 1, 128>}, {pipeline_mode = #tpu.pipeline_mode<synchronous>, transform_indices = @transform_10, window_bounds = array<i64: 1, 128>}, {pipeline_mode = #tpu.pipeline_mode<synchronous>, transform_indices = @transform_11, window_bounds = array<i64: 1, 128>}, {pipeline_mode = #tpu.pipeline_mode<synchronous>, transform_indices = @transform_12, window_bounds = array<i64: 128, 128>}, {pipeline_mode = #tpu.pipeline_mode<synchronous>, transform_indices = @transform_13, window_bounds = array<i64: 1, 128>}, {pipeline_mode = #tpu.pipeline_mode<synchronous>, transform_indices = @transform_14, window_bounds = array<i64: 128, 128>}, {pipeline_mode = #tpu.pipeline_mode<synchronous>, transform_indices = @transform_15, window_bounds = array<i64: 1, 128>}, {transform_indices = @transform_16, window_bounds = array<i64: 1, 2, 8, 128>}]} {
    %0 = arith.index_cast %arg0 : i32 to index
    %c0 = arith.constant 0 : index
    %c0_0 = arith.constant 0 : index
    %1 = vector.load %arg1[%0, %c0, %c0_0] : memref<2x8x128xf32, #tpu.memory_space<vmem>>, vector<1x8x128xf32>
    %2 = vector.shape_cast %1 : vector<1x8x128xf32> to vector<8x128xf32>
    %c0_1 = arith.constant 0 : index
    %c0_2 = arith.constant 0 : index
    %3 = vector.load %arg9[%c0_1, %c0_2] : memref<1x128xf32, #tpu.memory_space<vmem>>, vector<1x128xf32>
    %c0_3 = arith.constant 0 : index
    %c0_4 = arith.constant 0 : index
    %4 = vector.load %arg10[%c0_3, %c0_4] : memref<1x128xf32, #tpu.memory_space<vmem>>, vector<1x128xf32>
    %cst = arith.constant dense<0.000000e+00> : vector<8xf32>
    %5 = vector.multi_reduction <add>, %2, %cst [1] : vector<8x128xf32> to vector<8xf32>
    %6 = vector.shape_cast %5 : vector<8xf32> to vector<8x1xf32>
    %cst_5 = arith.constant 1.280000e+02 : f32
    %7 = vector.broadcast %cst_5 : f32 to vector<8x1xf32>
    %8 = arith.divf %6, %7 : vector<8x1xf32>
    %9 = vector.broadcast %8 : vector<8x1xf32> to vector<8x128xf32>
    %10 = arith.subf %2, %9 : vector<8x128xf32>
    %11 = arith.mulf %10, %10 : vector<8x128xf32>
    %cst_6 = arith.constant dense<0.000000e+00> : vector<8xf32>
    %12 = vector.multi_reduction <add>, %11, %cst_6 [1] : vector<8x128xf32> to vector<8xf32>
    %13 = vector.shape_cast %12 : vector<8xf32> to vector<8x1xf32>
    %cst_7 = arith.constant 1.280000e+02 : f32
    %14 = vector.broadcast %cst_7 : f32 to vector<8x1xf32>
    %15 = arith.divf %13, %14 : vector<8x1xf32>
    %16 = vector.broadcast %8 : vector<8x1xf32> to vector<8x128xf32>
    %17 = arith.subf %2, %16 : vector<8x128xf32>
    %cst_8 = arith.constant 9.99999974E-6 : f32
    %18 = vector.broadcast %cst_8 : f32 to vector<8x1xf32>
    %19 = arith.addf %15, %18 : vector<8x1xf32>
    %20 = math.rsqrt %19 : vector<8x1xf32>
    %21 = vector.broadcast %20 : vector<8x1xf32> to vector<8x128xf32>
    %22 = arith.mulf %17, %21 : vector<8x128xf32>
    %23 = vector.broadcast %3 : vector<1x128xf32> to vector<8x128xf32>
    %24 = arith.mulf %22, %23 : vector<8x128xf32>
    %25 = vector.broadcast %4 : vector<1x128xf32> to vector<8x128xf32>
    %26 = arith.addf %24, %25 : vector<8x128xf32>
    %c0_9 = arith.constant 0 : index
    %c0_10 = arith.constant 0 : index
    %27 = vector.load %arg3[%c0_9, %c0_10] : memref<128x128xf32, #tpu.memory_space<vmem>>, vector<128x128xf32>
    %cst_11 = arith.constant dense<0.000000e+00> : vector<8x128xf32>
    %28 = tpu.matmul %26, %27, %cst_11 {dimension_numbers = #tpu.dot_dimension_numbers<[1], [0], [0], [1], [0, 0, 1, 1], [], []>} : vector<8x128xf32>, vector<128x128xf32>, vector<8x128xf32> -> vector<8x128xf32>
    %c0_12 = arith.constant 0 : index
    %c0_13 = arith.constant 0 : index
    %29 = vector.load %arg4[%c0_12, %c0_13] : memref<1x128xf32, #tpu.memory_space<vmem>>, vector<1x128xf32>
    %30 = vector.broadcast %29 : vector<1x128xf32> to vector<8x128xf32>
    %31 = arith.addf %28, %30 : vector<8x128xf32>
    %c0_14 = arith.constant 0 : index
    %c0_15 = arith.constant 0 : index
    %32 = vector.load %arg5[%c0_14, %c0_15] : memref<128x128xf32, #tpu.memory_space<vmem>>, vector<128x128xf32>
    %cst_16 = arith.constant dense<0.000000e+00> : vector<8x128xf32>
    %33 = tpu.matmul %26, %32, %cst_16 {dimension_numbers = #tpu.dot_dimension_numbers<[1], [0], [0], [1], [0, 0, 1, 1], [], []>} : vector<8x128xf32>, vector<128x128xf32>, vector<8x128xf32> -> vector<8x128xf32>
    %c0_17 = arith.constant 0 : index
    %c0_18 = arith.constant 0 : index
    %34 = vector.load %arg6[%c0_17, %c0_18] : memref<1x128xf32, #tpu.memory_space<vmem>>, vector<1x128xf32>
    %35 = vector.broadcast %34 : vector<1x128xf32> to vector<8x128xf32>
    %36 = arith.addf %33, %35 : vector<8x128xf32>
    %c0_19 = arith.constant 0 : index
    %c0_20 = arith.constant 0 : index
    %37 = vector.load %arg7[%c0_19, %c0_20] : memref<128x128xf32, #tpu.memory_space<vmem>>, vector<128x128xf32>
    %cst_21 = arith.constant dense<0.000000e+00> : vector<8x128xf32>
    %38 = tpu.matmul %26, %37, %cst_21 {dimension_numbers = #tpu.dot_dimension_numbers<[1], [0], [0], [1], [0, 0, 1, 1], [], []>} : vector<8x128xf32>, vector<128x128xf32>, vector<8x128xf32> -> vector<8x128xf32>
    %c0_22 = arith.constant 0 : index
    %c0_23 = arith.constant 0 : index
    %39 = vector.load %arg8[%c0_22, %c0_23] : memref<1x128xf32, #tpu.memory_space<vmem>>, vector<1x128xf32>
    %40 = vector.broadcast %39 : vector<1x128xf32> to vector<8x128xf32>
    %41 = arith.addf %38, %40 : vector<8x128xf32>
    %cst_24 = arith.constant dense<0.000000e+00> : vector<8x8xf32>
    %42 = tpu.matmul %31, %36, %cst_24 {dimension_numbers = #tpu.dot_dimension_numbers<[1], [1], [0], [0], [0, 0, 1, 0], [], []>} : vector<8x128xf32>, vector<8x128xf32>, vector<8x8xf32> -> vector<8x8xf32>
    %c0_25 = arith.constant 0 : index
    %c0_26 = arith.constant 0 : index
    %c0_27 = arith.constant 0 : index
    %c0_28 = arith.constant 0 : index
    %43 = vector.load %arg2[%c0_25, %c0_26, %c0_27, %c0_28] : memref<1x1x8x8xf32, #tpu.memory_space<vmem>>, vector<1x1x8x8xf32>
    %44 = vector.shape_cast %43 : vector<1x1x8x8xf32> to vector<8x8xf32>
    %45 = arith.addf %42, %44 : vector<8x8xf32>
    %cst_29 = arith.constant dense<0xFF800000> : vector<8xf32>
    %46 = vector.multi_reduction <maximumf>, %45, %cst_29 [1] : vector<8x8xf32> to vector<8xf32>
    %47 = vector.shape_cast %46 : vector<8xf32> to vector<8x1xf32>
    %48 = vector.broadcast %47 : vector<8x1xf32> to vector<8x8xf32>
    %49 = arith.subf %45, %48 : vector<8x8xf32>
    %50 = math.exp %49 : vector<8x8xf32>
    %cst_30 = arith.constant dense<0.000000e+00> : vector<8xf32>
    %51 = vector.multi_reduction <add>, %50, %cst_30 [1] : vector<8x8xf32> to vector<8xf32>
    %52 = vector.shape_cast %51 : vector<8xf32> to vector<8x1xf32>
    %53 = tpu.reciprocal %52 {approx = true} : vector<8x1xf32> -> vector<8x1xf32>
    %54 = vector.broadcast %53 : vector<8x1xf32> to vector<8x8xf32>
    %55 = arith.mulf %50, %54 : vector<8x8xf32>
    %cst_31 = arith.constant dense<0.000000e+00> : vector<8x128xf32>
    %56 = tpu.matmul %55, %41, %cst_31 {dimension_numbers = #tpu.dot_dimension_numbers<[1], [0], [0], [1], [0, 0, 1, 1], [], []>} : vector<8x8xf32>, vector<8x128xf32>, vector<8x128xf32> -> vector<8x128xf32>
    %c0_32 = arith.constant 0 : index
    %c0_33 = arith.constant 0 : index
    %c0_34 = arith.constant 0 : index
    %57 = vector.load %arg1[%c0_32, %c0_33, %c0_34] : memref<2x8x128xf32, #tpu.memory_space<vmem>>, vector<2x8x128xf32>
    %58 = vector.shape_cast %56 : vector<8x128xf32> to vector<1x8x128xf32>
    %59 = vector.broadcast %58 : vector<1x8x128xf32> to vector<2x8x128xf32>
    %60 = arith.addf %57, %59 : vector<2x8x128xf32>
    %c0_35 = arith.constant 0 : index
    %c0_36 = arith.constant 0 : index
    %61 = vector.load %arg11[%c0_35, %c0_36] : memref<1x128xf32, #tpu.memory_space<vmem>>, vector<1x128xf32>
    %c0_37 = arith.constant 0 : index
    %c0_38 = arith.constant 0 : index
    %62 = vector.load %arg12[%c0_37, %c0_38] : memref<1x128xf32, #tpu.memory_space<vmem>>, vector<1x128xf32>
    %cst_39 = arith.constant dense<0.000000e+00> : vector<2x8xf32>
    %63 = vector.multi_reduction <add>, %60, %cst_39 [2] : vector<2x8x128xf32> to vector<2x8xf32>
    %64 = vector.shape_cast %63 : vector<2x8xf32> to vector<2x8x1xf32>
    %cst_40 = arith.constant 1.280000e+02 : f32
    %65 = vector.broadcast %cst_40 : f32 to vector<2x8x1xf32>
    %66 = arith.divf %64, %65 : vector<2x8x1xf32>
    %67 = vector.broadcast %66 : vector<2x8x1xf32> to vector<2x8x128xf32>
    %68 = arith.subf %60, %67 : vector<2x8x128xf32>
    %69 = arith.mulf %68, %68 : vector<2x8x128xf32>
    %cst_41 = arith.constant dense<0.000000e+00> : vector<2x8xf32>
    %70 = vector.multi_reduction <add>, %69, %cst_41 [2] : vector<2x8x128xf32> to vector<2x8xf32>
    %71 = vector.shape_cast %70 : vector<2x8xf32> to vector<2x8x1xf32>
    %cst_42 = arith.constant 1.280000e+02 : f32
    %72 = vector.broadcast %cst_42 : f32 to vector<2x8x1xf32>
    %73 = arith.divf %71, %72 : vector<2x8x1xf32>
    %74 = vector.broadcast %66 : vector<2x8x1xf32> to vector<2x8x128xf32>
    %75 = arith.subf %60, %74 : vector<2x8x128xf32>
    %cst_43 = arith.constant 9.99999974E-6 : f32
    %76 = vector.broadcast %cst_43 : f32 to vector<2x8x1xf32>
    %77 = arith.addf %73, %76 : vector<2x8x1xf32>
    %78 = math.rsqrt %77 : vector<2x8x1xf32>
    %79 = vector.broadcast %78 : vector<2x8x1xf32> to vector<2x8x128xf32>
    %80 = arith.mulf %75, %79 : vector<2x8x128xf32>
    %81 = vector.shape_cast %61 : vector<1x128xf32> to vector<1x1x128xf32>
    %82 = vector.broadcast %81 : vector<1x1x128xf32> to vector<2x8x128xf32>
    %83 = arith.mulf %80, %82 : vector<2x8x128xf32>
    %84 = vector.shape_cast %62 : vector<1x128xf32> to vector<1x1x128xf32>
    %85 = vector.broadcast %84 : vector<1x1x128xf32> to vector<2x8x128xf32>
    %86 = arith.addf %83, %85 : vector<2x8x128xf32>
    %87 = vector.shape_cast %86 : vector<2x8x128xf32> to vector<16x128xf32>
    %c0_44 = arith.constant 0 : index
    %c0_45 = arith.constant 0 : index
    %88 = vector.load %arg13[%c0_44, %c0_45] : memref<128x128xf32, #tpu.memory_space<vmem>>, vector<128x128xf32>
    %cst_46 = arith.constant dense<0.000000e+00> : vector<16x128xf32>
    %89 = tpu.matmul %87, %88, %cst_46 {dimension_numbers = #tpu.dot_dimension_numbers<[1], [0], [0], [1], [0, 0, 1, 1], [], []>} : vector<16x128xf32>, vector<128x128xf32>, vector<16x128xf32> -> vector<16x128xf32>
    %c0_47 = arith.constant 0 : index
    %c0_48 = arith.constant 0 : index
    %90 = vector.load %arg14[%c0_47, %c0_48] : memref<1x128xf32, #tpu.memory_space<vmem>>, vector<1x128xf32>
    %91 = vector.broadcast %90 : vector<1x128xf32> to vector<16x128xf32>
    %92 = arith.addf %89, %91 : vector<16x128xf32>
    %cst_49 = arith.constant 0.000000e+00 : f32
    %93 = vector.broadcast %cst_49 : f32 to vector<16x128xf32>
    %94 = arith.maximumf %92, %93 : vector<16x128xf32>
    %c0_50 = arith.constant 0 : index
    %c0_51 = arith.constant 0 : index
    %95 = vector.load %arg15[%c0_50, %c0_51] : memref<128x128xf32, #tpu.memory_space<vmem>>, vector<128x128xf32>
    %cst_52 = arith.constant dense<0.000000e+00> : vector<16x128xf32>
    %96 = tpu.matmul %94, %95, %cst_52 {dimension_numbers = #tpu.dot_dimension_numbers<[1], [0], [0], [1], [0, 0, 1, 1], [], []>} : vector<16x128xf32>, vector<128x128xf32>, vector<16x128xf32> -> vector<16x128xf32>
    %c0_53 = arith.constant 0 : index
    %c0_54 = arith.constant 0 : index
    %97 = vector.load %arg16[%c0_53, %c0_54] : memref<1x128xf32, #tpu.memory_space<vmem>>, vector<1x128xf32>
    %98 = vector.broadcast %97 : vector<1x128xf32> to vector<16x128xf32>
    %99 = arith.addf %96, %98 : vector<16x128xf32>
    %100 = vector.shape_cast %99 : vector<16x128xf32> to vector<2x8x128xf32>
    %c0_55 = arith.constant 0 : index
    %c0_56 = arith.constant 0 : index
    %c0_57 = arith.constant 0 : index
    %c0_58 = arith.constant 0 : index
    %101 = vector.load %arg17[%c0_55, %c0_56, %c0_57, %c0_58] : memref<1x2x8x128xf32, #tpu.memory_space<vmem>>, vector<1x2x8x128xf32>
    %102 = vector.shape_cast %101 : vector<1x2x8x128xf32> to vector<2x8x128xf32>
    %103 = vector.shape_cast %100 : vector<2x8x128xf32> to vector<1x2x8x128xf32>
    tpu.vector_store %arg17[%c0_55, %c0_56, %c0_57, %c0_58], %103 {strides = array<i32>} : memref<1x2x8x128xf32, #tpu.memory_space<vmem>>, vector<1x2x8x128xf32>,
    return
  }
  func.func @transform_0(%arg0: i32) -> (i32, i32, i32) {
    %c0_i32 = arith.constant 0 : i32
    %c0_i32_0 = arith.constant 0 : i32
    %c0_i32_1 = arith.constant 0 : i32
    %c0_i32_2 = arith.constant 0 : i32
    return %c0_i32, %c0_i32_0, %c0_i32_1 : i32, i32, i32
  }
  func.func @transform_1(%arg0: i32) -> (i32, i32, i32, i32) {
    %c0_i32 = arith.constant 0 : i32
    %c0_i32_0 = arith.constant 0 : i32
    %c0_i32_1 = arith.constant 0 : i32
    %c0_i32_2 = arith.constant 0 : i32
    return %arg0, %c0_i32, %c0_i32_0, %c0_i32_1 : i32, i32, i32, i32
  }
  func.func @transform_2(%arg0: i32) -> (i32, i32) {
    %c0_i32 = arith.constant 0 : i32
    %c0_i32_0 = arith.constant 0 : i32
    %c0_i32_1 = arith.constant 0 : i32
    return %c0_i32, %c0_i32_0 : i32, i32
  }
  func.func @transform_3(%arg0: i32) -> (i32, i32) {
    %c0_i32 = arith.constant 0 : i32
    %c0_i32_0 = arith.constant 0 : i32
    %c0_i32_1 = arith.constant 0 : i32
    return %c0_i32, %c0_i32_0 : i32, i32
  }
  func.func @transform_4(%arg0: i32) -> (i32, i32) {
    %c0_i32 = arith.constant 0 : i32
    %c0_i32_0 = arith.constant 0 : i32
    %c0_i32_1 = arith.constant 0 : i32
    return %c0_i32, %c0_i32_0 : i32, i32
  }
  func.func @transform_5(%arg0: i32) -> (i32, i32) {
    %c0_i32 = arith.constant 0 : i32
    %c0_i32_0 = arith.constant 0 : i32
    %c0_i32_1 = arith.constant 0 : i32
    return %c0_i32, %c0_i32_0 : i32, i32
  }
  func.func @transform_6(%arg0: i32) -> (i32, i32) {
    %c0_i32 = arith.constant 0 : i32
    %c0_i32_0 = arith.constant 0 : i32
    %c0_i32_1 = arith.constant 0 : i32
    return %c0_i32, %c0_i32_0 : i32, i32
  }
  func.func @transform_7(%arg0: i32) -> (i32, i32) {
    %c0_i32 = arith.constant 0 : i32
    %c0_i32_0 = arith.constant 0 : i32
    %c0_i32_1 = arith.constant 0 : i32
    return %c0_i32, %c0_i32_0 : i32, i32
  }
  func.func @transform_8(%arg0: i32) -> (i32, i32) {
    %c0_i32 = arith.constant 0 : i32
    %c0_i32_0 = arith.constant 0 : i32
    %c0_i32_1 = arith.constant 0 : i32
    return %c0_i32, %c0_i32_0 : i32, i32
  }
  func.func @transform_9(%arg0: i32) -> (i32, i32) {
    %c0_i32 = arith.constant 0 : i32
    %c0_i32_0 = arith.constant 0 : i32
    %c0_i32_1 = arith.constant 0 : i32
    return %c0_i32, %c0_i32_0 : i32, i32
  }
  func.func @transform_10(%arg0: i32) -> (i32, i32) {
    %c0_i32 = arith.constant 0 : i32
    %c0_i32_0 = arith.constant 0 : i32
    %c0_i32_1 = arith.constant 0 : i32
    return %c0_i32, %c0_i32_0 : i32, i32
  }
  func.func @transform_11(%arg0: i32) -> (i32, i32) {
    %c0_i32 = arith.constant 0 : i32
    %c0_i32_0 = arith.constant 0 : i32
    %c0_i32_1 = arith.constant 0 : i32
    return %c0_i32, %c0_i32_0 : i32, i32
  }
  func.func @transform_12(%arg0: i32) -> (i32, i32) {
    %c0_i32 = arith.constant 0 : i32
    %c0_i32_0 = arith.constant 0 : i32
    %c0_i32_1 = arith.constant 0 : i32
    return %c0_i32, %c0_i32_0 : i32, i32
  }
  func.func @transform_13(%arg0: i32) -> (i32, i32) {
    %c0_i32 = arith.constant 0 : i32
    %c0_i32_0 = arith.constant 0 : i32
    %c0_i32_1 = arith.constant 0 : i32
    return %c0_i32, %c0_i32_0 : i32, i32
  }
  func.func @transform_14(%arg0: i32) -> (i32, i32) {
    %c0_i32 = arith.constant 0 : i32
    %c0_i32_0 = arith.constant 0 : i32
    %c0_i32_1 = arith.constant 0 : i32
    return %c0_i32, %c0_i32_0 : i32, i32
  }
  func.func @transform_15(%arg0: i32) -> (i32, i32) {
    %c0_i32 = arith.constant 0 : i32
    %c0_i32_0 = arith.constant 0 : i32
    %c0_i32_1 = arith.constant 0 : i32
    return %c0_i32, %c0_i32_0 : i32, i32
  }
  func.func @transform_16(%arg0: i32) -> (i32, i32, i32, i32) {
    %c0_i32 = arith.constant 0 : i32
    %c0_i32_0 = arith.constant 0 : i32
    %c0_i32_1 = arith.constant 0 : i32
    %c0_i32_2 = arith.constant 0 : i32
    return %arg0, %c0_i32, %c0_i32_0, %c0_i32_1 : i32, i32, i32, i32
  }
}

</mosaic_0001>

<llo_original>
// kernel: tpu_custom_call.1
$region0: #{tpu_custom_call.1}
  #allocation0 [shape = 'u32[]', space=smem, size = 0x4, offset = 0x4, fixed_abs, tag = 'smem constant byte address 0x4 - core index']
  #allocation1 [shape = 'u32[72,128]{1,0:T(1,128)}', space=vmem, size = 0x9000, scoped, tag = 'internal scratch']
  %s0 = inlined_call_operand.hbm [shape: f32[2,8,128], index: 0, kind: input, shape index: {}]
  %s1 = inlined_call_operand.hbm [shape: f32[2,1,8,8], index: 1, kind: input, shape index: {}]
  %s2 = inlined_call_operand.hbm [shape: f32[128,128], index: 2, kind: input, shape index: {}]
  %s3 = inlined_call_operand.vmem [shape: f32[1,128], index: 3, kind: input, shape index: {}]
  %s4 = inlined_call_operand.hbm [shape: f32[128,128], index: 4, kind: input, shape index: {}]
  %s5 = inlined_call_operand.vmem [shape: f32[1,128], index: 5, kind: input, shape index: {}]
  %s6 = inlined_call_operand.hbm [shape: f32[128,128], index: 6, kind: input, shape index: {}]
  %s7 = inlined_call_operand.vmem [shape: f32[1,128], index: 7, kind: input, shape index: {}]
  %s8 = inlined_call_operand.vmem [shape: f32[1,128], index: 8, kind: input, shape index: {}]
  %s9 = inlined_call_operand.vmem [shape: f32[1,128], index: 9, kind: input, shape index: {}]
  %s10 = inlined_call_operand.vmem [shape: f32[1,128], index: 10, kind: input, shape index: {}]
  %s11 = inlined_call_operand.vmem [shape: f32[1,128], index: 11, kind: input, shape index: {}]
  %s12 = inlined_call_operand.hbm [shape: f32[128,128], index: 12, kind: input, shape index: {}]
  %s13 = inlined_call_operand.vmem [shape: f32[1,128], index: 13, kind: input, shape index: {}]
  %s14 = inlined_call_operand.hbm [shape: f32[128,128], index: 14, kind: input, shape index: {}]
  %s15 = inlined_call_operand.vmem [shape: f32[1,128], index: 15, kind: input, shape index: {}]
  %s16 = inlined_call_operand.hbm [shape: f32[2,2,8,128], index: 16, kind: output, shape index: {}]
  %s17 = sld [smem:[#allocation0]]
  $region125: #{tpu_custom_call.1} parent=0
    _
  %s19 = ssub.s32 1, %s17
  %s20 = scalar_select 0, %s19, %s17
  $region1: #{tpu_custom_call.1} parent=0
    #allocation2 [shape = 'u8[8192]{0}', space=vmem, size = 0x2000, scoped, tag = 'input window, operand 0, single buffered']
    #allocation3 [shape = 's32[2]{0}', space=sflag, size = 0x8, scoped, tag = 'scoped memory for tpu_custom_call.1']
    #allocation4 [shape = 's32[2]{0}', space=sflag, size = 0x8, scoped, tag = 'scoped memory for tpu_custom_call.1']
    #allocation5 [shape = 'u8[8192]{0}', space=vmem, size = 0x2000, scoped, tag = 'input window, operand 1']
    #allocation6 [shape = 's32[2]{0}', space=sflag, size = 0x8, scoped, tag = 'scoped memory for tpu_custom_call.1']
    #allocation7 [shape = 'u8[65536]{0}', space=vmem, size = 0x10000, scoped, tag = 'input window, operand 2, single buffered']
    #allocation8 [shape = 'u8[65536]{0}', space=vmem, size = 0x10000, scoped, tag = 'input window, operand 4, single buffered']
    #allocation9 [shape = 's32[1]{0}', space=sflag, size = 0x4, scoped, tag = 'scoped memory for tpu_custom_call.1']
    #allocation10 [shape = 'u8[65536]{0}', space=vmem, size = 0x10000, scoped, tag = 'input window, operand 6, single buffered']
    #allocation11 [shape = 'u8[65536]{0}', space=vmem, size = 0x10000, scoped, tag = 'input window, operand 12, single buffered']
    #allocation12 [shape = 's32[1]{0}', space=sflag, size = 0x4, scoped, tag = 'scoped memory for tpu_custom_call.1']
    #allocation13 [shape = 'u8[65536]{0}', space=vmem, size = 0x10000, scoped, tag = 'input window, operand 14, single buffered']
    #allocation14 [shape = 'u8[16384]{0}', space=vmem, size = 0x4000, scoped, tag = 'output window, operand 0']
    %21 = vsyncpa [#allocation3], 0
    %22 = vsyncpa [#allocation6], 0
    %s23 = scalar_lea.sflag [#allocation6], 1
    %24 = vsyncpa %s23, 0
    %25 = vsyncpa [#allocation9], 0
    %26 = vsyncpa [#allocation12], 0
    %27 = vsyncpa [#allocation4], 0
    %s28 = scalar_lea.sflag [#allocation4], 1
    %29 = vsyncpa %s28, 0
    loop: start=0, step=1, limit=4
    $region2: #{tpu_custom_call.1} parent=1 // loop_pre_header
      _
    $region3: #{tpu_custom_call.1} parent=1 // loop_header
      %s31 = sphi 0, %s35
      %p32 = scmp.ge.s32.totalorder %s31, 4
      %s39 = sphi 0, %s39
      %s41 = sphi 0, %s39
      %s42 = sphi 0, %s41
      %s56 = sphi 0, %s42
      %s62 = sphi 0, %s64
      %s65 = sphi 0, %s62
      %s66 = sphi 0, %s65
      %s82 = sphi 0, %s66
      %s86 = sphi 0, %s86
      %s88 = sphi 0, %s86
      %s89 = sphi 0, %s88
      %s103 = sphi 0, %s89
      %s107 = sphi 0, %s107
      %s109 = sphi 0, %s107
      %s110 = sphi 0, %s109
      %s124 = sphi 0, %s110
      %s128 = sphi 0, %s128
      %s130 = sphi 0, %s128
      %s131 = sphi 0, %s130
      %s145 = sphi 0, %s131
      %s149 = sphi 0, %s149
      %s151 = sphi 0, %s149
      %s152 = sphi 0, %s151
      %s166 = sphi 0, %s152
      %s170 = sphi 0, %s170
      %s172 = sphi 0, %s170
      %s173 = sphi 0, %s172
      %s187 = sphi 0, %s173
      %s191 = sphi 0, %s191
      %s193 = sphi 0, %s191
      %s194 = sphi 0, %s193
      %s208 = sphi 0, %s194
      %s212 = sphi 0, %s212
      %s214 = sphi 0, %s212
      %s215 = sphi 0, %s214
      %s229 = sphi 0, %s215
      %s233 = sphi 0, %s233
      %s235 = sphi 0, %s233
      %s236 = sphi 0, %s235
      %s250 = sphi 0, %s236
      %s254 = sphi 0, %s254
      %s256 = sphi 0, %s254
      %s257 = sphi 0, %s256
      %s271 = sphi 0, %s257
      %s275 = sphi 0, %s275
      %s277 = sphi 0, %s275
      %s278 = sphi 0, %s277
      %s292 = sphi 0, %s278
      %s296 = sphi 0, %s296
      %s298 = sphi 0, %s296
      %s299 = sphi 0, %s298
      %s313 = sphi 0, %s299
      %s317 = sphi 0, %s317
      %s319 = sphi 0, %s317
      %s320 = sphi 0, %s319
      %s334 = sphi 0, %s320
      %s338 = sphi 0, %s338
      %s340 = sphi 0, %s338
      %s341 = sphi 0, %s340
      %s355 = sphi 0, %s341
      %s359 = sphi 0, %s359
      %s361 = sphi 0, %s359
      %s362 = sphi 0, %s361
      %s376 = sphi 0, %s362
      %s382 = sphi 0, %s384
      %s385 = sphi 0, %s382
      %s386 = sphi 0, %s385
      %s402 = sphi 0, %s386
    $region4: #{tpu_custom_call.1} parent=1 // loop_header_branch
      %34 = sbr.rel (%p32) target = $region8
    $region5: #{tpu_custom_call.1} parent=1 // loop_body
      %s36 = ssub.s32 %s31, 1
      %s37 = ssub.s32 %s31, 2
      %s38 = sadd.s32 %s31, 1
      %s40 = sadd.s32 %s39, 1
      %p43 = scmp.eq.s32.totalorder %s31, 1
      %p44 = scmp.ne.s32.totalorder %s39, %s41
      %p45 = scmp.eq.s32.totalorder %s31, 0
      %p46 = por %p44, %p45
      %p47 = scmp.ne.s32.totalorder %s39, %s41
      %p48 = scmp.eq.s32.totalorder %s36, 1
      %p49 = por %p47, %p48
      %p50 = scmp.ne.s32.totalorder %s41, %s42
      %p51 = scmp.eq.s32.totalorder %s36, 0
      %p52 = por %p50, %p51
      %p53 = scmp.ne.s32.totalorder %s41, %s42
      %p54 = scmp.eq.s32.totalorder %s37, 1
      %p55 = por %p53, %p54
      %p57 = scmp.ne.s32.totalorder %s42, %s56
      %p58 = scmp.eq.s32.totalorder %s37, 0
      %p59 = por %p57, %p58
      %s60 = ssub.s32 %s31, %s38
      %p61 = scmp.eq.s32.totalorder %s60, 0
      %s63 = sadd.s32 %s62, 1
      %s64 = scalar_select %p61, %s62, %s63
      %p67 = pneg %p61
      %p68 = scmp.eq.s32.totalorder %s31, 1
      %p69 = por %p67, %p68
      %p70 = scmp.ne.s32.totalorder %s62, %s65
      %p71 = scmp.eq.s32.totalorder %s31, 0
      %p72 = por %p70, %p71
      %p73 = scmp.ne.s32.totalorder %s62, %s65
      %p74 = scmp.eq.s32.totalorder %s36, 1
      %p75 = por %p73, %p74
      %p76 = scmp.ne.s32.totalorder %s65, %s66
      %p77 = scmp.eq.s32.totalorder %s36, 0
      %p78 = por %p76, %p77
      %p79 = scmp.ne.s32.totalorder %s65, %s66
      %p80 = scmp.eq.s32.totalorder %s37, 1
      %p81 = por %p79, %p80
      %p83 = scmp.ne.s32.totalorder %s66, %s82
      %p84 = scmp.eq.s32.totalorder %s37, 0
      %p85 = por %p83, %p84
      %s87 = sadd.s32 %s86, 1
      %p90 = scmp.eq.s32.totalorder %s31, 1
      %p91 = scmp.ne.s32.totalorder %s86, %s88
      %p92 = scmp.eq.s32.totalorder %s31, 0
      %p93 = por %p91, %p92
      %p94 = scmp.ne.s32.totalorder %s86, %s88
      %p95 = scmp.eq.s32.totalorder %s36, 1
      %p96 = por %p94, %p95
      %p97 = scmp.ne.s32.totalorder %s88, %s89
      %p98 = scmp.eq.s32.totalorder %s36, 0
      %p99 = por %p97, %p98
      %p100 = scmp.ne.s32.totalorder %s88, %s89
      %p101 = scmp.eq.s32.totalorder %s37, 1
      %p102 = por %p100, %p101
      %p104 = scmp.ne.s32.totalorder %s89, %s103
      %p105 = scmp.eq.s32.totalorder %s37, 0
      %p106 = por %p104, %p105
      %s108 = sadd.s32 %s107, 1
      %p111 = scmp.eq.s32.totalorder %s31, 1
      %p112 = scmp.ne.s32.totalorder %s107, %s109
      %p113 = scmp.eq.s32.totalorder %s31, 0
      %p114 = por %p112, %p113
      %p115 = scmp.ne.s32.totalorder %s107, %s109
      %p116 = scmp.eq.s32.totalorder %s36, 1
      %p117 = por %p115, %p116
      %p118 = scmp.ne.s32.totalorder %s109, %s110
      %p119 = scmp.eq.s32.totalorder %s36, 0
      %p120 = por %p118, %p119
      %p121 = scmp.ne.s32.totalorder %s109, %s110
      %p122 = scmp.eq.s32.totalorder %s37, 1
      %p123 = por %p121, %p122
      %p125 = scmp.ne.s32.totalorder %s110, %s124
      %p126 = scmp.eq.s32.totalorder %s37, 0
      %p127 = por %p125, %p126
      %s129 = sadd.s32 %s128, 1
      %p132 = scmp.eq.s32.totalorder %s31, 1
      %p133 = scmp.ne.s32.totalorder %s128, %s130
      %p134 = scmp.eq.s32.totalorder %s31, 0
      %p135 = por %p133, %p134
      %p136 = scmp.ne.s32.totalorder %s128, %s130
      %p137 = scmp.eq.s32.totalorder %s36, 1
      %p138 = por %p136, %p137
      %p139 = scmp.ne.s32.totalorder %s130, %s131
      %p140 = scmp.eq.s32.totalorder %s36, 0
      %p141 = por %p139, %p140
      %p142 = scmp.ne.s32.totalorder %s130, %s131
      %p143 = scmp.eq.s32.totalorder %s37, 1
      %p144 = por %p142, %p143
      %p146 = scmp.ne.s32.totalorder %s131, %s145
      %p147 = scmp.eq.s32.totalorder %s37, 0
      %p148 = por %p146, %p147
      %s150 = sadd.s32 %s149, 1
      %p153 = scmp.eq.s32.totalorder %s31, 1
      %p154 = scmp.ne.s32.totalorder %s149, %s151
      %p155 = scmp.eq.s32.totalorder %s31, 0
      %p156 = por %p154, %p155
      %p157 = scmp.ne.s32.totalorder %s149, %s151
      %p158 = scmp.eq.s32.totalorder %s36, 1
      %p159 = por %p157, %p158
      %p160 = scmp.ne.s32.totalorder %s151, %s152
      %p161 = scmp.eq.s32.totalorder %s36, 0
      %p162 = por %p160, %p161
      %p163 = scmp.ne.s32.totalorder %s151, %s152
      %p164 = scmp.eq.s32.totalorder %s37, 1
      %p165 = por %p163, %p164
      %p167 = scmp.ne.s32.totalorder %s152, %s166
      %p168 = scmp.eq.s32.totalorder %s37, 0
      %p169 = por %p167, %p168
      %s171 = sadd.s32 %s170, 1
      %p174 = scmp.eq.s32.totalorder %s31, 1
      %p175 = scmp.ne.s32.totalorder %s170, %s172
      %p176 = scmp.eq.s32.totalorder %s31, 0
      %p177 = por %p175, %p176
      %p178 = scmp.ne.s32.totalorder %s170, %s172
      %p179 = scmp.eq.s32.totalorder %s36, 1
      %p180 = por %p178, %p179
      %p181 = scmp.ne.s32.totalorder %s172, %s173
      %p182 = scmp.eq.s32.totalorder %s36, 0
      %p183 = por %p181, %p182
      %p184 = scmp.ne.s32.totalorder %s172, %s173
      %p185 = scmp.eq.s32.totalorder %s37, 1
      %p186 = por %p184, %p185
      %p188 = scmp.ne.s32.totalorder %s173, %s187
      %p189 = scmp.eq.s32.totalorder %s37, 0
      %p190 = por %p188, %p189
      %s192 = sadd.s32 %s191, 1
      %p195 = scmp.eq.s32.totalorder %s31, 1
      %p196 = scmp.ne.s32.totalorder %s191, %s193
      %p197 = scmp.eq.s32.totalorder %s31, 0
      %p198 = por %p196, %p197
      %p199 = scmp.ne.s32.totalorder %s191, %s193
      %p200 = scmp.eq.s32.totalorder %s36, 1
      %p201 = por %p199, %p200
      %p202 = scmp.ne.s32.totalorder %s193, %s194
      %p203 = scmp.eq.s32.totalorder %s36, 0
      %p204 = por %p202, %p203
      %p205 = scmp.ne.s32.totalorder %s193, %s194
      %p206 = scmp.eq.s32.totalorder %s37, 1
      %p207 = por %p205, %p206
      %p209 = scmp.ne.s32.totalorder %s194, %s208
      %p210 = scmp.eq.s32.totalorder %s37, 0
      %p211 = por %p209, %p210
      %s213 = sadd.s32 %s212, 1
      %p216 = scmp.eq.s32.totalorder %s31, 1
      %p217 = scmp.ne.s32.totalorder %s212, %s214
      %p218 = scmp.eq.s32.totalorder %s31, 0
      %p219 = por %p217, %p218
      %p220 = scmp.ne.s32.totalorder %s212, %s214
      %p221 = scmp.eq.s32.totalorder %s36, 1
      %p222 = por %p220, %p221
      %p223 = scmp.ne.s32.totalorder %s214, %s215
      %p224 = scmp.eq.s32.totalorder %s36, 0
      %p225 = por %p223, %p224
      %p226 = scmp.ne.s32.totalorder %s214, %s215
      %p227 = scmp.eq.s32.totalorder %s37, 1
      %p228 = por %p226, %p227
      %p230 = scmp.ne.s32.totalorder %s215, %s229
      %p231 = scmp.eq.s32.totalorder %s37, 0
      %p232 = por %p230, %p231
      %s234 = sadd.s32 %s233, 1
      %p237 = scmp.eq.s32.totalorder %s31, 1
      %p238 = scmp.ne.s32.totalorder %s233, %s235
      %p239 = scmp.eq.s32.totalorder %s31, 0
      %p240 = por %p238, %p239
      %p241 = scmp.ne.s32.totalorder %s233, %s235
      %p242 = scmp.eq.s32.totalorder %s36, 1
      %p243 = por %p241, %p242
      %p244 = scmp.ne.s32.totalorder %s235, %s236
      %p245 = scmp.eq.s32.totalorder %s36, 0
      %p246 = por %p244, %p245
      %p247 = scmp.ne.s32.totalorder %s235, %s236
      %p248 = scmp.eq.s32.totalorder %s37, 1
      %p249 = por %p247, %p248
      %p251 = scmp.ne.s32.totalorder %s236, %s250
      %p252 = scmp.eq.s32.totalorder %s37, 0
      %p253 = por %p251, %p252
      %s255 = sadd.s32 %s254, 1
      %p258 = scmp.eq.s32.totalorder %s31, 1
      %p259 = scmp.ne.s32.totalorder %s254, %s256
      %p260 = scmp.eq.s32.totalorder %s31, 0
      %p261 = por %p259, %p260
      %p262 = scmp.ne.s32.totalorder %s254, %s256
      %p263 = scmp.eq.s32.totalorder %s36, 1
      %p264 = por %p262, %p263
      %p265 = scmp.ne.s32.totalorder %s256, %s257
      %p266 = scmp.eq.s32.totalorder %s36, 0
      %p267 = por %p265, %p266
      %p268 = scmp.ne.s32.totalorder %s256, %s257
      %p269 = scmp.eq.s32.totalorder %s37, 1
      %p270 = por %p268, %p269
      %p272 = scmp.ne.s32.totalorder %s257, %s271
      %p273 = scmp.eq.s32.totalorder %s37, 0
      %p274 = por %p272, %p273
      %s276 = sadd.s32 %s275, 1
      %p279 = scmp.eq.s32.totalorder %s31, 1
      %p280 = scmp.ne.s32.totalorder %s275, %s277
      %p281 = scmp.eq.s32.totalorder %s31, 0
      %p282 = por %p280, %p281
      %p283 = scmp.ne.s32.totalorder %s275, %s277
      %p284 = scmp.eq.s32.totalorder %s36, 1
      %p285 = por %p283, %p284
      %p286 = scmp.ne.s32.totalorder %s277, %s278
      %p287 = scmp.eq.s32.totalorder %s36, 0
      %p288 = por %p286, %p287
      %p289 = scmp.ne.s32.totalorder %s277, %s278
      %p290 = scmp.eq.s32.totalorder %s37, 1
      %p291 = por %p289, %p290
      %p293 = scmp.ne.s32.totalorder %s278, %s292
      %p294 = scmp.eq.s32.totalorder %s37, 0
      %p295 = por %p293, %p294
      %s297 = sadd.s32 %s296, 1
      %p300 = scmp.eq.s32.totalorder %s31, 1
      %p301 = scmp.ne.s32.totalorder %s296, %s298
      %p302 = scmp.eq.s32.totalorder %s31, 0
      %p303 = por %p301, %p302
      %p304 = scmp.ne.s32.totalorder %s296, %s298
      %p305 = scmp.eq.s32.totalorder %s36, 1
      %p306 = por %p304, %p305
      %p307 = scmp.ne.s32.totalorder %s298, %s299
      %p308 = scmp.eq.s32.totalorder %s36, 0
      %p309 = por %p307, %p308
      %p310 = scmp.ne.s32.totalorder %s298, %s299
      %p311 = scmp.eq.s32.totalorder %s37, 1
      %p312 = por %p310, %p311
      %p314 = scmp.ne.s32.totalorder %s299, %s313
      %p315 = scmp.eq.s32.totalorder %s37, 0
      %p316 = por %p314, %p315
      %s318 = sadd.s32 %s317, 1
      %p321 = scmp.eq.s32.totalorder %s31, 1
      %p322 = scmp.ne.s32.totalorder %s317, %s319
      %p323 = scmp.eq.s32.totalorder %s31, 0
      %p324 = por %p322, %p323
      %p325 = scmp.ne.s32.totalorder %s317, %s319
      %p326 = scmp.eq.s32.totalorder %s36, 1
      %p327 = por %p325, %p326
      %p328 = scmp.ne.s32.totalorder %s319, %s320
      %p329 = scmp.eq.s32.totalorder %s36, 0
      %p330 = por %p328, %p329
      %p331 = scmp.ne.s32.totalorder %s319, %s320
      %p332 = scmp.eq.s32.totalorder %s37, 1
      %p333 = por %p331, %p332
      %p335 = scmp.ne.s32.totalorder %s320, %s334
      %p336 = scmp.eq.s32.totalorder %s37, 0
      %p337 = por %p335, %p336
      %s339 = sadd.s32 %s338, 1
      %p342 = scmp.eq.s32.totalorder %s31, 1
      %p343 = scmp.ne.s32.totalorder %s338, %s340
      %p344 = scmp.eq.s32.totalorder %s31, 0
      %p345 = por %p343, %p344
      %p346 = scmp.ne.s32.totalorder %s338, %s340
      %p347 = scmp.eq.s32.totalorder %s36, 1
      %p348 = por %p346, %p347
      %p349 = scmp.ne.s32.totalorder %s340, %s341
      %p350 = scmp.eq.s32.totalorder %s36, 0
      %p351 = por %p349, %p350
      %p352 = scmp.ne.s32.totalorder %s340, %s341
      %p353 = scmp.eq.s32.totalorder %s37, 1
      %p354 = por %p352, %p353
      %p356 = scmp.ne.s32.totalorder %s341, %s355
      %p357 = scmp.eq.s32.totalorder %s37, 0
      %p358 = por %p356, %p357
      %s360 = sadd.s32 %s359, 1
      %p363 = scmp.eq.s32.totalorder %s31, 1
      %p364 = scmp.ne.s32.totalorder %s359, %s361
      %p365 = scmp.eq.s32.totalorder %s31, 0
      %p366 = por %p364, %p365
      %p367 = scmp.ne.s32.totalorder %s359, %s361
      %p368 = scmp.eq.s32.totalorder %s36, 1
      %p369 = por %p367, %p368
      %p370 = scmp.ne.s32.totalorder %s361, %s362
      %p371 = scmp.eq.s32.totalorder %s36, 0
      %p372 = por %p370, %p371
      %p373 = scmp.ne.s32.totalorder %s361, %s362
      %p374 = scmp.eq.s32.totalorder %s37, 1
      %p375 = por %p373, %p374
      %p377 = scmp.ne.s32.totalorder %s362, %s376
      %p378 = scmp.eq.s32.totalorder %s37, 0
      %p379 = por %p377, %p378
      %s380 = ssub.s32 %s31, %s38
      %p381 = scmp.eq.s32.totalorder %s380, 0
      %s383 = sadd.s32 %s382, 1
      %s384 = scalar_select %p381, %s382, %s383
      %p387 = pneg %p381
      %p388 = scmp.eq.s32.totalorder %s31, 1
      %p389 = por %p387, %p388
      %p390 = scmp.ne.s32.totalorder %s382, %s385
      %p391 = scmp.eq.s32.totalorder %s31, 0
      %p392 = por %p390, %p391
      %p393 = scmp.ne.s32.totalorder %s382, %s385
      %p394 = scmp.eq.s32.totalorder %s36, 1
      %p395 = por %p393, %p394
      %p396 = scmp.ne.s32.totalorder %s385, %s386
      %p397 = scmp.eq.s32.totalorder %s36, 0
      %p398 = por %p396, %p397
      %p399 = scmp.ne.s32.totalorder %s385, %s386
      %p400 = scmp.eq.s32.totalorder %s37, 1
      %p401 = por %p399, %p400
      %p403 = scmp.ne.s32.totalorder %s386, %s402
      %p404 = scmp.eq.s32.totalorder %s37, 0
      %p405 = por %p403, %p404
      %p406 = scmp.le.s32.totalorder 1, %s31
      %p407 = scmp.lt.s32.totalorder %s31, 3
      %p408 = pnand %p406, %p407
      %p409 = pneg %p408
      // Predicated region
      $region9: #{tpu_custom_call.1} parent=5 // pred_check
        _
      $region10: #{tpu_custom_call.1} parent=5 // pred_check_branch
        %411 = sbr.rel (%p408) target = $region12
      $region11: #{tpu_custom_call.1} parent=5 // pred_region
        %s412 = ssub.s32 %s31, 1
        // Predicated region
        $region13: #{tpu_custom_call.1} parent=11 // pred_check
          %p413 = pneg %p52
        $region14: #{tpu_custom_call.1} parent=11 // pred_check_branch
          %415 = sbr.rel (%p413) target = $region16
        $region15: #{tpu_custom_call.1} parent=11 // pred_region
          %417 = vsyncadd [#allocation3], 0
          %s418 = sshll.u32 %s0, 4
          %s419 = int_to_ptr.hbm [resolvable:$true] %s418
          %s420 = sshll.u32 [#allocation2], 4
          %s421 = int_to_ptr.vmem [resolvable:$true] %s420
          %426 = dma.hbm_to_vmem [thread:$0]  %s419, 256, %s421, [#allocation3], 128, 128, 8
        $region16: #{tpu_custom_call.1} parent=11 // pred_fallthru
          _
        // Predicated region
        $region17: #{tpu_custom_call.1} parent=11 // pred_check
          %p427 = pneg %p99
        $region18: #{tpu_custom_call.1} parent=11 // pred_check_branch
          %429 = sbr.rel (%p427) target = $region20
        $region19: #{tpu_custom_call.1} parent=11 // pred_region
          %431 = vsyncadd [#allocation6], 0
          %s432 = sshll.u32 %s2, 4
          %s433 = int_to_ptr.hbm [resolvable:$true] %s432
          %s434 = sshll.u32 [#allocation7], 4
          %s435 = int_to_ptr.vmem [resolvable:$true] %s434
          %440 = dma.hbm_to_vmem [thread:$0]  %s433, 2048, %s435, [#allocation6], 128, 128, 8
        $region20: #{tpu_custom_call.1} parent=11 // pred_fallthru
          _
        // Predicated region
        $region21: #{tpu_custom_call.1} parent=11 // pred_check
          %p441 = pneg %p120
        $region22: #{tpu_custom_call.1} parent=11 // pred_check_branch
          %443 = sbr.rel (%p441) target = $region24
        $region23: #{tpu_custom_call.1} parent=11 // pred_region
          _
        $region24: #{tpu_custom_call.1} parent=11 // pred_fallthru
          _
        // Predicated region
        $region25: #{tpu_custom_call.1} parent=11 // pred_check
          %p444 = pneg %p141
        $region26: #{tpu_custom_call.1} parent=11 // pred_check_branch
          %446 = sbr.rel (%p444) target = $region28
        $region27: #{tpu_custom_call.1} parent=11 // pred_region
          %448 = vsyncadd [#allocation9], 0
          %s449 = sshll.u32 %s4, 4
          %s450 = int_to_ptr.hbm [resolvable:$true] %s449
          %s451 = sshll.u32 [#allocation8], 4
          %s452 = int_to_ptr.vmem [resolvable:$true] %s451
          %457 = dma.hbm_to_vmem [thread:$0]  %s450, 2048, %s452, [#allocation9], 128, 128, 8
        $region28: #{tpu_custom_call.1} parent=11 // pred_fallthru
          _
        // Predicated region
        $region29: #{tpu_custom_call.1} parent=11 // pred_check
          %p458 = pneg %p162
        $region30: #{tpu_custom_call.1} parent=11 // pred_check_branch
          %460 = sbr.rel (%p458) target = $region32
        $region31: #{tpu_custom_call.1} parent=11 // pred_region
          _
        $region32: #{tpu_custom_call.1} parent=11 // pred_fallthru
          _
        // Predicated region
        $region33: #{tpu_custom_call.1} parent=11 // pred_check
          %p461 = pneg %p183
        $region34: #{tpu_custom_call.1} parent=11 // pred_check_branch
          %463 = sbr.rel (%p461) target = $region36
        $region35: #{tpu_custom_call.1} parent=11 // pred_region
          %465 = vsyncadd [#allocation9], 0
          %s466 = sshll.u32 %s6, 4
          %s467 = int_to_ptr.hbm [resolvable:$true] %s466
          %s468 = sshll.u32 [#allocation10], 4
          %s469 = int_to_ptr.vmem [resolvable:$true] %s468
          %474 = dma.hbm_to_vmem [thread:$0]  %s467, 2048, %s469, [#allocation9], 128, 128, 8
        $region36: #{tpu_custom_call.1} parent=11 // pred_fallthru
          _
        // Predicated region
        $region37: #{tpu_custom_call.1} parent=11 // pred_check
          %p475 = pneg %p204
        $region38: #{tpu_custom_call.1} parent=11 // pred_check_branch
          %477 = sbr.rel (%p475) target = $region40
        $region39: #{tpu_custom_call.1} parent=11 // pred_region
          _
        $region40: #{tpu_custom_call.1} parent=11 // pred_fallthru
          _
        // Predicated region
        $region41: #{tpu_custom_call.1} parent=11 // pred_check
          %p478 = pneg %p225
        $region42: #{tpu_custom_call.1} parent=11 // pred_check_branch
          %480 = sbr.rel (%p478) target = $region44
        $region43: #{tpu_custom_call.1} parent=11 // pred_region
          _
        $region44: #{tpu_custom_call.1} parent=11 // pred_fallthru
          _
        // Predicated region
        $region45: #{tpu_custom_call.1} parent=11 // pred_check
          %p481 = pneg %p246
        $region46: #{tpu_custom_call.1} parent=11 // pred_check_branch
          %483 = sbr.rel (%p481) target = $region48
        $region47: #{tpu_custom_call.1} parent=11 // pred_region
          _
        $region48: #{tpu_custom_call.1} parent=11 // pred_fallthru
          _
        // Predicated region
        $region49: #{tpu_custom_call.1} parent=11 // pred_check
          %p484 = pneg %p267
        $region50: #{tpu_custom_call.1} parent=11 // pred_check_branch
          %486 = sbr.rel (%p484) target = $region52
        $region51: #{tpu_custom_call.1} parent=11 // pred_region
          _
        $region52: #{tpu_custom_call.1} parent=11 // pred_fallthru
          _
        // Predicated region
        $region53: #{tpu_custom_call.1} parent=11 // pred_check
          %p487 = pneg %p288
        $region54: #{tpu_custom_call.1} parent=11 // pred_check_branch
          %489 = sbr.rel (%p487) target = $region56
        $region55: #{tpu_custom_call.1} parent=11 // pred_region
          _
        $region56: #{tpu_custom_call.1} parent=11 // pred_fallthru
          _
        // Predicated region
        $region57: #{tpu_custom_call.1} parent=11 // pred_check
          %p490 = pneg %p309
        $region58: #{tpu_custom_call.1} parent=11 // pred_check_branch
          %492 = sbr.rel (%p490) target = $region60
        $region59: #{tpu_custom_call.1} parent=11 // pred_region
          %494 = vsyncadd [#allocation12], 0
          %s495 = sshll.u32 %s12, 4
          %s496 = int_to_ptr.hbm [resolvable:$true] %s495
          %s497 = sshll.u32 [#allocation11], 4
          %s498 = int_to_ptr.vmem [resolvable:$true] %s497
          %503 = dma.hbm_to_vmem [thread:$0]  %s496, 2048, %s498, [#allocation12], 128, 128, 8
        $region60: #{tpu_custom_call.1} parent=11 // pred_fallthru
          _
        // Predicated region
        $region61: #{tpu_custom_call.1} parent=11 // pred_check
          %p504 = pneg %p330
        $region62: #{tpu_custom_call.1} parent=11 // pred_check_branch
          %506 = sbr.rel (%p504) target = $region64
        $region63: #{tpu_custom_call.1} parent=11 // pred_region
          _
        $region64: #{tpu_custom_call.1} parent=11 // pred_fallthru
          _
        // Predicated region
        $region65: #{tpu_custom_call.1} parent=11 // pred_check
          %p507 = pneg %p351
        $region66: #{tpu_custom_call.1} parent=11 // pred_check_branch
          %509 = sbr.rel (%p507) target = $region68
        $region67: #{tpu_custom_call.1} parent=11 // pred_region
          %511 = vsyncadd [#allocation12], 0
          %s512 = sshll.u32 %s14, 4
          %s513 = int_to_ptr.hbm [resolvable:$true] %s512
          %s514 = sshll.u32 [#allocation13], 4
          %s515 = int_to_ptr.vmem [resolvable:$true] %s514
          %520 = dma.hbm_to_vmem [thread:$0]  %s513, 2048, %s515, [#allocation12], 128, 128, 8
        $region68: #{tpu_custom_call.1} parent=11 // pred_fallthru
          _
        // Predicated region
        $region69: #{tpu_custom_call.1} parent=11 // pred_check
          %p521 = pneg %p372
        $region70: #{tpu_custom_call.1} parent=11 // pred_check_branch
          %523 = sbr.rel (%p521) target = $region72
        $region71: #{tpu_custom_call.1} parent=11 // pred_region
          _
        $region72: #{tpu_custom_call.1} parent=11 // pred_fallthru
          _
      $region12: #{tpu_custom_call.1} parent=5 // pred_fallthru
        _
      %p524 = scmp.lt.s32.totalorder %s31, 2
      // Predicated region
      $region73: #{tpu_custom_call.1} parent=5 // pred_check
        %p525 = pneg %p524
      $region74: #{tpu_custom_call.1} parent=5 // pred_check_branch
        %527 = sbr.rel (%p525) target = $region76
      $region75: #{tpu_custom_call.1} parent=5 // pred_region
        // Predicated region
        $region77: #{tpu_custom_call.1} parent=75 // pred_check
          %p528 = pneg %p72
        $region78: #{tpu_custom_call.1} parent=75 // pred_check_branch
          %530 = sbr.rel (%p528) target = $region80
        $region79: #{tpu_custom_call.1} parent=75 // pred_region
          %s531 = sand.u32 %s31, 1
          %s532 = scalar_lea.sflag [#allocation6], %s531
          %s533 = sand.u32 %s62, 1
          %s534 = smul.addr %s533, 8
          %s535 = scalar_lea.vmem [#allocation5], %s534
          %537 = vsyncadd %s532, 0
          %s538 = smul.addr %s31, 8
          %s539 = scalar_lea.hbm %s1, %s538
          %s541 = sshll.u32 %s539, 4
          %s542 = int_to_ptr.hbm [resolvable:$true] %s541
          %s543 = sshll.u32 %s535, 4
          %s544 = int_to_ptr.vmem [resolvable:$true] %s543
          %546 = dma.hbm_to_vmem [thread:$0]  %s542, 128, %s544, %s532
        $region80: #{tpu_custom_call.1} parent=75 // pred_fallthru
          _
      $region76: #{tpu_custom_call.1} parent=5 // pred_fallthru
        _
      %p547 = scmp.le.s32.totalorder 1, %s31
      %p548 = scmp.lt.s32.totalorder %s31, 3
      %p549 = pnand %p547, %p548
      %p550 = pneg %p549
      // Predicated region
      $region81: #{tpu_custom_call.1} parent=5 // pred_check
        _
      $region82: #{tpu_custom_call.1} parent=5 // pred_check_branch
        %552 = sbr.rel (%p549) target = $region84
      $region83: #{tpu_custom_call.1} parent=5 // pred_region
        %s553 = ssub.s32 %s31, 1
        // Predicated region
        $region85: #{tpu_custom_call.1} parent=83 // pred_check
          %p554 = pneg %p52
        $region86: #{tpu_custom_call.1} parent=83 // pred_check_branch
          %556 = sbr.rel (%p554) target = $region88
        $region87: #{tpu_custom_call.1} parent=83 // pred_region
          %558 = dma.done [#allocation3], 256
        $region88: #{tpu_custom_call.1} parent=83 // pred_fallthru
          _
        %s559 = sand.u32 %s36, 1
        %s560 = scalar_lea.sflag [#allocation6], %s559
        %s561 = sand.u32 %s65, 1
        %s562 = smul.addr %s561, 8
        %s563 = scalar_lea.vmem [#allocation5], %s562
        // Predicated region
        $region89: #{tpu_custom_call.1} parent=83 // pred_check
          %p564 = pneg %p78
        $region90: #{tpu_custom_call.1} parent=83 // pred_check_branch
          %566 = sbr.rel (%p564) target = $region92
        $region91: #{tpu_custom_call.1} parent=83 // pred_region
          %568 = dma.done %s560, 128
        $region92: #{tpu_custom_call.1} parent=83 // pred_fallthru
          _
        // Predicated region
        $region93: #{tpu_custom_call.1} parent=83 // pred_check
          %p569 = pneg %p99
        $region94: #{tpu_custom_call.1} parent=83 // pred_check_branch
          %571 = sbr.rel (%p569) target = $region96
        $region95: #{tpu_custom_call.1} parent=83 // pred_region
          %573 = dma.done [#allocation6], 2048
        $region96: #{tpu_custom_call.1} parent=83 // pred_fallthru
          _
        // Predicated region
        $region97: #{tpu_custom_call.1} parent=83 // pred_check
          %p574 = pneg %p141
        $region98: #{tpu_custom_call.1} parent=83 // pred_check_branch
          %576 = sbr.rel (%p574) target = $region100
        $region99: #{tpu_custom_call.1} parent=83 // pred_region
          %578 = dma.done [#allocation9], 2048
        $region100: #{tpu_custom_call.1} parent=83 // pred_fallthru
          _
        // Predicated region
        $region101: #{tpu_custom_call.1} parent=83 // pred_check
          %p579 = pneg %p183
        $region102: #{tpu_custom_call.1} parent=83 // pred_check_branch
          %581 = sbr.rel (%p579) target = $region104
        $region103: #{tpu_custom_call.1} parent=83 // pred_region
          %583 = dma.done [#allocation9], 2048
        $region104: #{tpu_custom_call.1} parent=83 // pred_fallthru
          _
        // Predicated region
        $region105: #{tpu_custom_call.1} parent=83 // pred_check
          %p584 = pneg %p309
        $region106: #{tpu_custom_call.1} parent=83 // pred_check_branch
          %586 = sbr.rel (%p584) target = $region108
        $region107: #{tpu_custom_call.1} parent=83 // pred_region
          %588 = dma.done [#allocation12], 2048
        $region108: #{tpu_custom_call.1} parent=83 // pred_fallthru
          _
        // Predicated region
        $region109: #{tpu_custom_call.1} parent=83 // pred_check
          %p589 = pneg %p351
        $region110: #{tpu_custom_call.1} parent=83 // pred_check_branch
          %591 = sbr.rel (%p589) target = $region112
        $region111: #{tpu_custom_call.1} parent=83 // pred_region
          %593 = dma.done [#allocation12], 2048
        $region112: #{tpu_custom_call.1} parent=83 // pred_fallthru
          _
        %p594 = pneg %p52
        %p595 = pneg %p49
        %s596 = sand.u32 %s36, 1
        %s597 = scalar_lea.sflag [#allocation6], %s596
        %s598 = sand.u32 %s65, 1
        %s599 = smul.addr %s598, 8
        %s600 = scalar_lea.vmem [#allocation5], %s599
        %p601 = pneg %p78
        %p602 = pneg %p75
        %p603 = pneg %p99
        %p604 = pneg %p96
        %p605 = pneg %p120
        %p606 = pneg %p117
        %p607 = pneg %p141
        %p608 = pneg %p138
        %p609 = pneg %p162
        %p610 = pneg %p159
        %p611 = pneg %p183
        %p612 = pneg %p180
        %p613 = pneg %p204
        %p614 = pneg %p201
        %p615 = pneg %p225
        %p616 = pneg %p222
        %p617 = pneg %p246
        %p618 = pneg %p243
        %p619 = pneg %p267
        %p620 = pneg %p264
        %p621 = pneg %p288
        %p622 = pneg %p285
        %p623 = pneg %p309
        %p624 = pneg %p306
        %p625 = pneg %p330
        %p626 = pneg %p327
        %p627 = pneg %p351
        %p628 = pneg %p348
        %p629 = pneg %p372
        %p630 = pneg %p369
        %p631 = pneg %p398
        %p632 = pneg %p395
        %s633 = sand.u32 %s385, 1
        %s634 = scalar_lea.sflag [#allocation4], %s633
        %s635 = sand.u32 %s385, 1
        %s636 = smul.addr %s635, 16
        %s637 = scalar_lea.vmem [#allocation14], %s636
        %s638 = smul.u32 %s36, 8
        %s639 = scalar_lea.vmem [#allocation2], %s638
        %v640 = vld [vmem:[%s639] sm:$0xff]
        %v641 = vld [vmem:[%s8] sm:$0x1]
        %v642 = vld [vmem:[%s9] sm:$0x1]
        %643 = vadd.xlane.f32.xlu0 %v640
        %v644 = vpop.xlane.xlu0 %643
        %v645 = vrcp.pop 128.0
        %v646 = vmul.f32 128.0, %v645
        %v647 = vsub.f32 1.0, %v646
        %v648 = vmul.f32 %v645, %v647
        %v649 = vadd.f32 %v645, %v648
        %vm650 = vweird.f32 %v645
        %v651 = vsel %vm650, %v645, %v649
        %v652 = vmul.f32 %v644, %v651
        %v653 = vsub.f32 %v640, %v652
        %v654 = vmul.f32 %v653, %v653
        %655 = vadd.xlane.f32.xlu0 %v654
        %v656 = vpop.xlane.xlu0 %655
        %v657 = vmul.f32 %v656, %v651
        %v658 = vadd.f32 %v657, 1e-05
        %v659 = vrsqrt.pop %v658
        %v660 = vmul.f32 %v659, %v658
        %v661 = vmul.f32 %v660, %v659
        %v662 = vmul.f32 0.5, %v661
        %v663 = vsub.f32 1.5, %v662
        %v664 = vmul.f32 %v659, %v663
        %vm665 = vweird.f32 %v658
        %vm666 = vweird.f32 %v659
        %vm667 = vmor %vm665, %vm666
        %v668 = vsel %vm667, %v659, %v664
        %v669 = vmul.f32 %v653, %v668
        %v671 = vperm.slane %v641, 0
        %v673 = vmul.f32 %v669, %v671
        %v675 = vperm.slane %v642, 0
        %v677 = vadd.f32 %v673, %v675
        %v678 = vld [vmem:[#allocation7] sm:$0xff]
        %v679 = vld [vmem:[#allocation7 + $0x8] sm:$0xff]
        %v680 = vld [vmem:[#allocation7 + $0x10] sm:$0xff]
        %v681 = vld [vmem:[#allocation7 + $0x18] sm:$0xff]
        %v682 = vld [vmem:[#allocation7 + $0x20] sm:$0xff]
        %v683 = vld [vmem:[#allocation7 + $0x28] sm:$0xff]
        %v684 = vld [vmem:[#allocation7 + $0x30] sm:$0xff]
        %v685 = vld [vmem:[#allocation7 + $0x38] sm:$0xff]
        %v686 = vld [vmem:[#allocation7 + $0x40] sm:$0xff]
        %v687 = vld [vmem:[#allocation7 + $0x48] sm:$0xff]
        %v688 = vld [vmem:[#allocation7 + $0x50] sm:$0xff]
        %v689 = vld [vmem:[#allocation7 + $0x58] sm:$0xff]
        %v690 = vld [vmem:[#allocation7 + $0x60] sm:$0xff]
        %v691 = vld [vmem:[#allocation7 + $0x68] sm:$0xff]
        %v692 = vld [vmem:[#allocation7 + $0x70] sm:$0xff]
        %v693 = vld [vmem:[#allocation7 + $0x78] sm:$0xff]
        %v694 = vld [vmem:[%s3] sm:$0x1]
        %v696 = vperm.slane %v694, 0
        %698 = vmatpush.msra.mxu0 %v693
        %699 = vmatpush.msra.mxu0 %v692
        %700 = vmatpush.msra.mxu0 %v691
        %701 = vmatpush.msra.mxu0 %v690
        %702 = vmatpush.msra.mxu0 %v689
        %703 = vmatpush.msra.mxu0 %v688
        %704 = vmatpush.msra.mxu0 %v687
        %705 = vmatpush.msra.mxu0 %v686
        %706 = vmatpush.msra.mxu0 %v685
        %707 = vmatpush.msra.mxu0 %v684
        %708 = vmatpush.msra.mxu0 %v683
        %709 = vmatpush.msra.mxu0 %v682
        %710 = vmatpush.msra.mxu0 %v681
        %711 = vmatpush.msra.mxu0 %v680
        %712 = vmatpush.msra.mxu0 %v679
        %713 = vmatpush.msra.mxu0 %v678
        %714 = vmatmul.f32.gmra.mxu0 %v677
        %v715 = vpop.f32.mrf.mxu0
        %v716 = vadd.f32 %v696, %v715
        %717 = vdwg.mxu0
        %v718 = vld [vmem:[#allocation8] sm:$0xff]
        %v719 = vld [vmem:[#allocation8 + $0x8] sm:$0xff]
        %v720 = vld [vmem:[#allocation8 + $0x10] sm:$0xff]
        %v721 = vld [vmem:[#allocation8 + $0x18] sm:$0xff]
        %v722 = vld [vmem:[#allocation8 + $0x20] sm:$0xff]
        %v723 = vld [vmem:[#allocation8 + $0x28] sm:$0xff]
        %v724 = vld [vmem:[#allocation8 + $0x30] sm:$0xff]
        %v725 = vld [vmem:[#allocation8 + $0x38] sm:$0xff]
        %v726 = vld [vmem:[#allocation8 + $0x40] sm:$0xff]
        %v727 = vld [vmem:[#allocation8 + $0x48] sm:$0xff]
        %v728 = vld [vmem:[#allocation8 + $0x50] sm:$0xff]
        %v729 = vld [vmem:[#allocation8 + $0x58] sm:$0xff]
        %v730 = vld [vmem:[#allocation8 + $0x60] sm:$0xff]
        %v731 = vld [vmem:[#allocation8 + $0x68] sm:$0xff]
        %v732 = vld [vmem:[#allocation8 + $0x70] sm:$0xff]
        %v733 = vld [vmem:[#allocation8 + $0x78] sm:$0xff]
        %v734 = vld [vmem:[%s5] sm:$0x1]
        %v736 = vperm.slane %v734, 0
        %738 = vmatpush.msra.mxu0 %v733
        %739 = vmatpush.msra.mxu0 %v732
        %740 = vmatpush.msra.mxu0 %v731
        %741 = vmatpush.msra.mxu0 %v730
        %742 = vmatpush.msra.mxu0 %v729
        %743 = vmatpush.msra.mxu0 %v728
        %744 = vmatpush.msra.mxu0 %v727
        %745 = vmatpush.msra.mxu0 %v726
        %746 = vmatpush.msra.mxu0 %v725
        %747 = vmatpush.msra.mxu0 %v724
        %748 = vmatpush.msra.mxu0 %v723
        %749 = vmatpush.msra.mxu0 %v722
        %750 = vmatpush.msra.mxu0 %v721
        %751 = vmatpush.msra.mxu0 %v720
        %752 = vmatpush.msra.mxu0 %v719
        %753 = vmatpush.msra.mxu0 %v718
        %754 = vmatmul.f32.gmra.mxu0 %v677
        %v755 = vpop.f32.mrf.mxu0
        %v756 = vadd.f32 %v736, %v755
        %757 = vdwg.mxu0
        %v758 = vld [vmem:[#allocation10] sm:$0xff]
        %v759 = vld [vmem:[#allocation10 + $0x8] sm:$0xff]
        %v760 = vld [vmem:[#allocation10 + $0x10] sm:$0xff]
        %v761 = vld [vmem:[#allocation10 + $0x18] sm:$0xff]
        %v762 = vld [vmem:[#allocation10 + $0x20] sm:$0xff]
        %v763 = vld [vmem:[#allocation10 + $0x28] sm:$0xff]
        %v764 = vld [vmem:[#allocation10 + $0x30] sm:$0xff]
        %v765 = vld [vmem:[#allocation10 + $0x38] sm:$0xff]
        %v766 = vld [vmem:[#allocation10 + $0x40] sm:$0xff]
        %v767 = vld [vmem:[#allocation10 + $0x48] sm:$0xff]
        %v768 = vld [vmem:[#allocation10 + $0x50] sm:$0xff]
        %v769 = vld [vmem:[#allocation10 + $0x58] sm:$0xff]
        %v770 = vld [vmem:[#allocation10 + $0x60] sm:$0xff]
        %v771 = vld [vmem:[#allocation10 + $0x68] sm:$0xff]
        %v772 = vld [vmem:[#allocation10 + $0x70] sm:$0xff]
        %v773 = vld [vmem:[#allocation10 + $0x78] sm:$0xff]
        %v774 = vld [vmem:[%s7] sm:$0x1]
        %v776 = vperm.slane %v774, 0
        %778 = vmatpush.msra.mxu0 %v773
        %779 = vmatpush.msra.mxu0 %v772
        %780 = vmatpush.msra.mxu0 %v771
        %781 = vmatpush.msra.mxu0 %v770
        %782 = vmatpush.msra.mxu0 %v769
        %783 = vmatpush.msra.mxu0 %v768
        %784 = vmatpush.msra.mxu0 %v767
        %785 = vmatpush.msra.mxu0 %v766
        %786 = vmatpush.msra.mxu0 %v765
        %787 = vmatpush.msra.mxu0 %v764
        %788 = vmatpush.msra.mxu0 %v763
        %789 = vmatpush.msra.mxu0 %v762
        %790 = vmatpush.msra.mxu0 %v761
        %791 = vmatpush.msra.mxu0 %v760
        %792 = vmatpush.msra.mxu0 %v759
        %793 = vmatpush.msra.mxu0 %v758
        %794 = vmatmul.f32.gmra.mxu0 %v677
        %v795 = vpop.f32.mrf.mxu0
        %v796 = vadd.f32 %v776, %v795
        %797 = vdwg.mxu0
        %v798 = vld [vmem:[%s563] sm:$0xff]
        %799 = vmatpush.xpose.msra.mxu0 0.0
        %800 = vmatpush.xpose.msra.mxu0 0.0
        %801 = vmatpush.xpose.msra.mxu0 0.0
        %802 = vmatpush.xpose.msra.mxu0 0.0
        %803 = vmatpush.xpose.msra.mxu0 0.0
        %804 = vmatpush.xpose.msra.mxu0 0.0
        %805 = vmatpush.xpose.msra.mxu0 0.0
        %806 = vmatpush.xpose.msra.mxu0 0.0
        %807 = vmatpush.xpose.msra.mxu0 0.0
        %808 = vmatpush.xpose.msra.mxu0 0.0
        %809 = vmatpush.xpose.msra.mxu0 0.0
        %810 = vmatpush.xpose.msra.mxu0 0.0
        %811 = vmatpush.xpose.msra.mxu0 0.0
        %812 = vmatpush.xpose.msra.mxu0 0.0
        %813 = vmatpush.xpose.msra.mxu0 0.0
        %814 = vmatpush.xpose.msra.mxu0 %v756
        %815 = vmatmul.f32.gmra.mxu0 %v716
        %v816 = vpop.f32.mrf.mxu0
        %v817 = vadd.f32 %v798, %v816
        %818 = vdwg.mxu0
        %vm819 = vcmask 64512
        %v820 = vsel %vm819, %v817, -inf
        %821 = vmax.xlane.f32.xlu0 %v820
        %v822 = vpop.xlane.xlu0 %821
        %v823 = vsub.f32 %v817, %v822
        %v824 = vmul.f32 %v823, 1.442695
        %v825 = vpow.pop %v824
        %v826 = vsel %vm819, %v825, 0.0
        %827 = vadd.xlane.f32.xlu0 %v826
        %v828 = vpop.xlane.xlu0 %827
        %v829 = vrcp.pop %v828
        %v830 = vmul.f32 %v825, %v829
        %v832 = vsel %vm819, %v830, 0
        %834 = vmatpush.msra.mxu0 0.0
        %835 = vmatpush.msra.mxu0 0.0
        %836 = vmatpush.msra.mxu0 0.0
        %837 = vmatpush.msra.mxu0 0.0
        %838 = vmatpush.msra.mxu0 0.0
        %839 = vmatpush.msra.mxu0 0.0
        %840 = vmatpush.msra.mxu0 0.0
        %841 = vmatpush.msra.mxu0 0.0
        %842 = vmatpush.msra.mxu0 0.0
        %843 = vmatpush.msra.mxu0 0.0
        %844 = vmatpush.msra.mxu0 0.0
        %845 = vmatpush.msra.mxu0 0.0
        %846 = vmatpush.msra.mxu0 0.0
        %847 = vmatpush.msra.mxu0 0.0
        %848 = vmatpush.msra.mxu0 0.0
        %849 = vmatpush.msra.mxu0 %v796
        %850 = vmatmul.f32.gmra.mxu0 %v832
        %v851 = vpop.f32.mrf.mxu0
        %v852 = vadd.f32 0.0, %v851
        %853 = vdwg.mxu0
        %v854 = vld [vmem:[#allocation2] sm:$0xff]
        %v855 = vld [vmem:[#allocation2 + $0x8] sm:$0xff]
        %v856 = vadd.f32 %v854, %v852
        %v857 = vadd.f32 %v855, %v852
        %v858 = vld [vmem:[%s10] sm:$0x1]
        %v859 = vld [vmem:[%s11] sm:$0x1]
        %860 = vadd.xlane.f32.xlu0 %v856
        %v861 = vpop.xlane.xlu0 %860
        %862 = vadd.xlane.f32.xlu0 %v857
        %v863 = vpop.xlane.xlu0 %862
        %v864 = vmul.f32 %v861, %v651
        %v865 = vmul.f32 %v863, %v651
        %v866 = vsub.f32 %v856, %v864
        %v867 = vsub.f32 %v857, %v865
        %v868 = vmul.f32 %v866, %v866
        %v869 = vmul.f32 %v867, %v867
        %870 = vadd.xlane.f32.xlu0 %v868
        %v871 = vpop.xlane.xlu0 %870
        %872 = vadd.xlane.f32.xlu0 %v869
        %v873 = vpop.xlane.xlu0 %872
        %v874 = vmul.f32 %v871, %v651
        %v875 = vmul.f32 %v873, %v651
        %v876 = vadd.f32 %v874, 1e-05
        %v877 = vadd.f32 %v875, 1e-05
        %v878 = vrsqrt.pop %v876
        %v879 = vmul.f32 %v878, %v876
        %v880 = vmul.f32 %v879, %v878
        %v881 = vmul.f32 0.5, %v880
        %v882 = vsub.f32 1.5, %v881
        %v883 = vmul.f32 %v878, %v882
        %vm884 = vweird.f32 %v876
        %vm885 = vweird.f32 %v878
        %vm886 = vmor %vm884, %vm885
        %v887 = vsel %vm886, %v878, %v883
        %v888 = vrsqrt.pop %v877
        %v889 = vmul.f32 %v888, %v877
        %v890 = vmul.f32 %v889, %v888
        %v891 = vmul.f32 0.5, %v890
        %v892 = vsub.f32 1.5, %v891
        %v893 = vmul.f32 %v888, %v892
        %vm894 = vweird.f32 %v877
        %vm895 = vweird.f32 %v888
        %vm896 = vmor %vm894, %vm895
        %v897 = vsel %vm896, %v888, %v893
        %v898 = vmul.f32 %v866, %v887
        %v899 = vmul.f32 %v867, %v897
        %v901 = vperm.slane %v858, 0
        %v903 = vmul.f32 %v898, %v901
        %v904 = vmul.f32 %v899, %v901
        %v906 = vperm.slane %v859, 0
        %v908 = vadd.f32 %v903, %v906
        %v909 = vadd.f32 %v904, %v906
        %v910 = vld [vmem:[#allocation11] sm:$0xff]
        %v911 = vld [vmem:[#allocation11 + $0x8] sm:$0xff]
        %v912 = vld [vmem:[#allocation11 + $0x10] sm:$0xff]
        %v913 = vld [vmem:[#allocation11 + $0x18] sm:$0xff]
        %v914 = vld [vmem:[#allocation11 + $0x20] sm:$0xff]
        %v915 = vld [vmem:[#allocation11 + $0x28] sm:$0xff]
        %v916 = vld [vmem:[#allocation11 + $0x30] sm:$0xff]
        %v917 = vld [vmem:[#allocation11 + $0x38] sm:$0xff]
        %v918 = vld [vmem:[#allocation11 + $0x40] sm:$0xff]
        %v919 = vld [vmem:[#allocation11 + $0x48] sm:$0xff]
        %v920 = vld [vmem:[#allocation11 + $0x50] sm:$0xff]
        %v921 = vld [vmem:[#allocation11 + $0x58] sm:$0xff]
        %v922 = vld [vmem:[#allocation11 + $0x60] sm:$0xff]
        %v923 = vld [vmem:[#allocation11 + $0x68] sm:$0xff]
        %v924 = vld [vmem:[#allocation11 + $0x70] sm:$0xff]
        %v925 = vld [vmem:[#allocation11 + $0x78] sm:$0xff]
        %v926 = vld [vmem:[%s13] sm:$0x1]
        %v928 = vperm.slane %v926, 0
        %930 = vmatpush.msra.mxu0 %v925
        %931 = vmatpush.msra.mxu0 %v924
        %932 = vmatpush.msra.mxu0 %v923
        %933 = vmatpush.msra.mxu0 %v922
        %934 = vmatpush.msra.mxu0 %v921
        %935 = vmatpush.msra.mxu0 %v920
        %936 = vmatpush.msra.mxu0 %v919
        %937 = vmatpush.msra.mxu0 %v918
        %938 = vmatpush.msra.mxu0 %v917
        %939 = vmatpush.msra.mxu0 %v916
        %940 = vmatpush.msra.mxu0 %v915
        %941 = vmatpush.msra.mxu0 %v914
        %942 = vmatpush.msra.mxu0 %v913
        %943 = vmatpush.msra.mxu0 %v912
        %944 = vmatpush.msra.mxu0 %v911
        %945 = vmatpush.msra.mxu0 %v910
        %946 = vmatmul.f32.gmra.mxu0 %v908
        %v947 = vpop.f32.mrf.mxu0
        %v948 = vadd.f32 %v928, %v947
        %949 = vmatmul.f32.gmra.mxu0 %v909
        %v950 = vpop.f32.mrf.mxu0
        %v951 = vadd.f32 %v928, %v950
        %952 = vdwg.mxu0
        %v953 = vmax.f32 %v948, 0.0
        %v954 = vmax.f32 %v951, 0.0
        %v955 = vld [vmem:[#allocation13] sm:$0xff]
        %v956 = vld [vmem:[#allocation13 + $0x8] sm:$0xff]
        %v957 = vld [vmem:[#allocation13 + $0x10] sm:$0xff]
        %v958 = vld [vmem:[#allocation13 + $0x18] sm:$0xff]
        %v959 = vld [vmem:[#allocation13 + $0x20] sm:$0xff]
        %v960 = vld [vmem:[#allocation13 + $0x28] sm:$0xff]
        %v961 = vld [vmem:[#allocation13 + $0x30] sm:$0xff]
        %v962 = vld [vmem:[#allocation13 + $0x38] sm:$0xff]
        %v963 = vld [vmem:[#allocation13 + $0x40] sm:$0xff]
        %v964 = vld [vmem:[#allocation13 + $0x48] sm:$0xff]
        %v965 = vld [vmem:[#allocation13 + $0x50] sm:$0xff]
        %v966 = vld [vmem:[#allocation13 + $0x58] sm:$0xff]
        %v967 = vld [vmem:[#allocation13 + $0x60] sm:$0xff]
        %v968 = vld [vmem:[#allocation13 + $0x68] sm:$0xff]
        %v969 = vld [vmem:[#allocation13 + $0x70] sm:$0xff]
        %v970 = vld [vmem:[#allocation13 + $0x78] sm:$0xff]
        %v971 = vld [vmem:[%s15] sm:$0x1]
        %v973 = vperm.slane %v971, 0
        %975 = vmatpush.msra.mxu0 %v970
        %976 = vmatpush.msra.mxu0 %v969
        %977 = vmatpush.msra.mxu0 %v968
        %978 = vmatpush.msra.mxu0 %v967
        %979 = vmatpush.msra.mxu0 %v966
        %980 = vmatpush.msra.mxu0 %v965
        %981 = vmatpush.msra.mxu0 %v964
        %982 = vmatpush.msra.mxu0 %v963
        %983 = vmatpush.msra.mxu0 %v962
        %984 = vmatpush.msra.mxu0 %v961
        %985 = vmatpush.msra.mxu0 %v960
        %986 = vmatpush.msra.mxu0 %v959
        %987 = vmatpush.msra.mxu0 %v958
        %988 = vmatpush.msra.mxu0 %v957
        %989 = vmatpush.msra.mxu0 %v956
        %990 = vmatpush.msra.mxu0 %v955
        %991 = vmatmul.f32.gmra.mxu0 %v953
        %v992 = vpop.f32.mrf.mxu0
        %v993 = vadd.f32 %v973, %v992
        %994 = vmatmul.f32.gmra.mxu0 %v954
        %v995 = vpop.f32.mrf.mxu0
        %v996 = vadd.f32 %v973, %v995
        %997 = vdwg.mxu0
        %998 = vst [vmem:[%s637] sm:$0xff] %v993
        %999 = vst [vmem:[%s637 + $0x8] sm:$0xff] %v996
        %s1000 = sand.u32 %s385, 1
        %s1001 = scalar_lea.sflag [#allocation4], %s1000
        %s1002 = sand.u32 %s385, 1
        %s1003 = smul.addr %s1002, 16
        %s1004 = scalar_lea.vmem [#allocation14], %s1003
        // Predicated region
        $region113: #{tpu_custom_call.1} parent=83 // pred_check
          %p1005 = pneg %p395
        $region114: #{tpu_custom_call.1} parent=83 // pred_check_branch
          %1007 = sbr.rel (%p1005) target = $region116
        $region115: #{tpu_custom_call.1} parent=83 // pred_region
          %1009 = vsyncadd %s1001, 0
          %s1010 = smul.addr %s36, 2
          %s1011 = smul.addr %s1010, 8
          %s1012 = scalar_lea.hbm %s16, %s1011
          %s1013 = sshll.u32 %s1004, 4
          %s1014 = int_to_ptr.vmem [resolvable:$true] %s1013
          %s1015 = sshll.u32 %s1012, 4
          %s1016 = int_to_ptr.hbm [resolvable:$true] %s1015
          %1021 = dma.vmem_to_hbm [thread:$0]  %s1014, 256, %s1016, %s1001, 128, 128, 8
        $region116: #{tpu_custom_call.1} parent=83 // pred_fallthru
          _
      $region84: #{tpu_custom_call.1} parent=5 // pred_fallthru
        _
      %p1022 = scmp.le.s32.totalorder 2, %s31
      // Predicated region
      $region117: #{tpu_custom_call.1} parent=5 // pred_check
        %p1023 = pneg %p1022
      $region118: #{tpu_custom_call.1} parent=5 // pred_check_branch
        %1025 = sbr.rel (%p1023) target = $region120
      $region119: #{tpu_custom_call.1} parent=5 // pred_region
        %s1026 = ssub.s32 %s31, 2
        // Predicated region
        $region121: #{tpu_custom_call.1} parent=119 // pred_check
          %p1027 = pneg %p401
        $region122: #{tpu_custom_call.1} parent=119 // pred_check_branch
          %1029 = sbr.rel (%p1027) target = $region124
        $region123: #{tpu_custom_call.1} parent=119 // pred_region
          %s1030 = sand.u32 %s386, 1
          %s1031 = scalar_lea.sflag [#allocation4], %s1030
          %s1032 = sand.u32 %s386, 1
          %s1033 = smul.addr %s1032, 16
          %s1034 = scalar_lea.vmem [#allocation14], %s1033
          %1036 = dma.done %s1031, 256
        $region124: #{tpu_custom_call.1} parent=119 // pred_fallthru
          _
      $region120: #{tpu_custom_call.1} parent=5 // pred_fallthru
        _
    $region6: #{tpu_custom_call.1} parent=1 // loop_footer
      %s35 = sadd.s32 1, %s31
    $region7: #{tpu_custom_call.1} parent=1 // loop_footer_branch
      %30 = sbr.rel target = $region3
    $region8: #{tpu_custom_call.1} parent=1 // loop_exit
      _
    %1037 = vsyncpa [#allocation3], 1
    %s1038 = scalar_lea.sflag [#allocation3], 1
    %1039 = vsyncpa %s1038, 1
    %1040 = vsyncpa [#allocation6], 1
    %s1041 = scalar_lea.sflag [#allocation6], 1
    %1042 = vsyncpa %s1041, 1
    %1043 = vsyncpa [#allocation9], 1
    %1044 = vsyncpa [#allocation12], 1
    %1045 = vsyncpa [#allocation4], 1
    %s1046 = scalar_lea.sflag [#allocation4], 1
    %1047 = vsyncpa %s1046, 1

// kernel: tpu_custom_call.1
$region0: #{tpu_custom_call.1}
  #allocation0 [shape = 'u32[]', space=smem, size = 0x4, offset = 0x4, fixed_abs, tag = 'smem constant byte address 0x4 - core index']
  #allocation1 [shape = 'u32[72,128]{1,0:T(1,128)}', space=vmem, size = 0x9000, scoped, tag = 'internal scratch']
  %s0 = inlined_call_operand.hbm [shape: f32[2,8,128], index: 0, kind: input, shape index: {}]
  %s1 = inlined_call_operand.hbm [shape: f32[2,1,8,8], index: 1, kind: input, shape index: {}]
  %s2 = inlined_call_operand.hbm [shape: f32[128,128], index: 2, kind: input, shape index: {}]
  %s3 = inlined_call_operand.vmem [shape: f32[1,128], index: 3, kind: input, shape index: {}]
  %s4 = inlined_call_operand.hbm [shape: f32[128,128], index: 4, kind: input, shape index: {}]
  %s5 = inlined_call_operand.vmem [shape: f32[1,128], index: 5, kind: input, shape index: {}]
  %s6 = inlined_call_operand.hbm [shape: f32[128,128], index: 6, kind: input, shape index: {}]
  %s7 = inlined_call_operand.vmem [shape: f32[1,128], index: 7, kind: input, shape index: {}]
  %s8 = inlined_call_operand.vmem [shape: f32[1,128], index: 8, kind: input, shape index: {}]
  %s9 = inlined_call_operand.vmem [shape: f32[1,128], index: 9, kind: input, shape index: {}]
  %s10 = inlined_call_operand.vmem [shape: f32[1,128], index: 10, kind: input, shape index: {}]
  %s11 = inlined_call_operand.vmem [shape: f32[1,128], index: 11, kind: input, shape index: {}]
  %s12 = inlined_call_operand.hbm [shape: f32[128,128], index: 12, kind: input, shape index: {}]
  %s13 = inlined_call_operand.vmem [shape: f32[1,128], index: 13, kind: input, shape index: {}]
  %s14 = inlined_call_operand.hbm [shape: f32[128,128], index: 14, kind: input, shape index: {}]
  %s15 = inlined_call_operand.vmem [shape: f32[1,128], index: 15, kind: input, shape index: {}]
  %s16 = inlined_call_operand.hbm [shape: f32[2,2,8,128], index: 16, kind: output, shape index: {}]
  %s17 = sld [smem:[#allocation0]]
  $region125: #{tpu_custom_call.1} parent=0
    _
  %s19 = ssub.s32 1, %s17
  %s20 = scalar_select 0, %s19, %s17
  $region1: #{tpu_custom_call.1} parent=0
    #allocation2 [shape = 'u8[8192]{0}', space=vmem, size = 0x2000, scoped, tag = 'input window, operand 0, single buffered']
    #allocation3 [shape = 's32[2]{0}', space=sflag, size = 0x8, scoped, tag = 'scoped memory for tpu_custom_call.1']
    #allocation4 [shape = 's32[2]{0}', space=sflag, size = 0x8, scoped, tag = 'scoped memory for tpu_custom_call.1']
    #allocation5 [shape = 'u8[8192]{0}', space=vmem, size = 0x2000, scoped, tag = 'input window, operand 1']
    #allocation6 [shape = 's32[2]{0}', space=sflag, size = 0x8, scoped, tag = 'scoped memory for tpu_custom_call.1']
    #allocation7 [shape = 'u8[65536]{0}', space=vmem, size = 0x10000, scoped, tag = 'input window, operand 2, single buffered']
    #allocation8 [shape = 'u8[65536]{0}', space=vmem, size = 0x10000, scoped, tag = 'input window, operand 4, single buffered']
    #allocation9 [shape = 's32[1]{0}', space=sflag, size = 0x4, scoped, tag = 'scoped memory for tpu_custom_call.1']
    #allocation10 [shape = 'u8[65536]{0}', space=vmem, size = 0x10000, scoped, tag = 'input window, operand 6, single buffered']
    #allocation11 [shape = 'u8[65536]{0}', space=vmem, size = 0x10000, scoped, tag = 'input window, operand 12, single buffered']
    #allocation12 [shape = 's32[1]{0}', space=sflag, size = 0x4, scoped, tag = 'scoped memory for tpu_custom_call.1']
    #allocation13 [shape = 'u8[65536]{0}', space=vmem, size = 0x10000, scoped, tag = 'input window, operand 14, single buffered']
    #allocation14 [shape = 'u8[16384]{0}', space=vmem, size = 0x4000, scoped, tag = 'output window, operand 0']
    %21 = vsyncpa [#allocation3], 0
    %22 = vsyncpa [#allocation6], 0
    %s23 = scalar_lea.sflag [#allocation6], 1
    %24 = vsyncpa %s23, 0
    %25 = vsyncpa [#allocation9], 0
    %26 = vsyncpa [#allocation12], 0
    %27 = vsyncpa [#allocation4], 0
    %s28 = scalar_lea.sflag [#allocation4], 1
    %29 = vsyncpa %s28, 0
    loop: start=0, step=1, limit=4
    $region2: #{tpu_custom_call.1} parent=1 // loop_pre_header
      _
    $region3: #{tpu_custom_call.1} parent=1 // loop_header
      %s31 = sphi 0, %s35
      %p32 = scmp.ge.s32.totalorder %s31, 4
      %s39 = sphi 0, %s39
      %s41 = sphi 0, %s39
      %s42 = sphi 0, %s41
      %s56 = sphi 0, %s42
      %s62 = sphi 0, %s64
      %s65 = sphi 0, %s62
      %s66 = sphi 0, %s65
      %s82 = sphi 0, %s66
      %s86 = sphi 0, %s86
      %s88 = sphi 0, %s86
      %s89 = sphi 0, %s88
      %s103 = sphi 0, %s89
      %s107 = sphi 0, %s107
      %s109 = sphi 0, %s107
      %s110 = sphi 0, %s109
      %s124 = sphi 0, %s110
      %s128 = sphi 0, %s128
      %s130 = sphi 0, %s128
      %s131 = sphi 0, %s130
      %s145 = sphi 0, %s131
      %s149 = sphi 0, %s149
      %s151 = sphi 0, %s149
      %s152 = sphi 0, %s151
      %s166 = sphi 0, %s152
      %s170 = sphi 0, %s170
      %s172 = sphi 0, %s170
      %s173 = sphi 0, %s172
      %s187 = sphi 0, %s173
      %s191 = sphi 0, %s191
      %s193 = sphi 0, %s191
      %s194 = sphi 0, %s193
      %s208 = sphi 0, %s194
      %s212 = sphi 0, %s212
      %s214 = sphi 0, %s212
      %s215 = sphi 0, %s214
      %s229 = sphi 0, %s215
      %s233 = sphi 0, %s233
      %s235 = sphi 0, %s233
      %s236 = sphi 0, %s235
      %s250 = sphi 0, %s236
      %s254 = sphi 0, %s254
      %s256 = sphi 0, %s254
      %s257 = sphi 0, %s256
      %s271 = sphi 0, %s257
      %s275 = sphi 0, %s275
      %s277 = sphi 0, %s275
      %s278 = sphi 0, %s277
      %s292 = sphi 0, %s278
      %s296 = sphi 0, %s296
      %s298 = sphi 0, %s296
      %s299 = sphi 0, %s298
      %s313 = sphi 0, %s299
      %s317 = sphi 0, %s317
      %s319 = sphi 0, %s317
      %s320 = sphi 0, %s319
      %s334 = sphi 0, %s320
      %s338 = sphi 0, %s338
      %s340 = sphi 0, %s338
      %s341 = sphi 0, %s340
      %s355 = sphi 0, %s341
      %s359 = sphi 0, %s359
      %s361 = sphi 0, %s359
      %s362 = sphi 0, %s361
      %s376 = sphi 0, %s362
      %s382 = sphi 0, %s384
      %s385 = sphi 0, %s382
      %s386 = sphi 0, %s385
      %s402 = sphi 0, %s386
    $region4: #{tpu_custom_call.1} parent=1 // loop_header_branch
      %34 = sbr.rel (%p32) target = $region8
    $region5: #{tpu_custom_call.1} parent=1 // loop_body
      %s36 = ssub.s32 %s31, 1
      %s37 = ssub.s32 %s31, 2
      %s38 = sadd.s32 %s31, 1
      %s40 = sadd.s32 %s39, 1
      %p43 = scmp.eq.s32.totalorder %s31, 1
      %p44 = scmp.ne.s32.totalorder %s39, %s41
      %p45 = scmp.eq.s32.totalorder %s31, 0
      %p46 = por %p44, %p45
      %p47 = scmp.ne.s32.totalorder %s39, %s41
      %p48 = scmp.eq.s32.totalorder %s36, 1
      %p49 = por %p47, %p48
      %p50 = scmp.ne.s32.totalorder %s41, %s42
      %p51 = scmp.eq.s32.totalorder %s36, 0
      %p52 = por %p50, %p51
      %p53 = scmp.ne.s32.totalorder %s41, %s42
      %p54 = scmp.eq.s32.totalorder %s37, 1
      %p55 = por %p53, %p54
      %p57 = scmp.ne.s32.totalorder %s42, %s56
      %p58 = scmp.eq.s32.totalorder %s37, 0
      %p59 = por %p57, %p58
      %s60 = ssub.s32 %s31, %s38
      %p61 = scmp.eq.s32.totalorder %s60, 0
      %s63 = sadd.s32 %s62, 1
      %s64 = scalar_select %p61, %s62, %s63
      %p67 = pneg %p61
      %p68 = scmp.eq.s32.totalorder %s31, 1
      %p69 = por %p67, %p68
      %p70 = scmp.ne.s32.totalorder %s62, %s65
      %p71 = scmp.eq.s32.totalorder %s31, 0
      %p72 = por %p70, %p71
      %p73 = scmp.ne.s32.totalorder %s62, %s65
      %p74 = scmp.eq.s32.totalorder %s36, 1
      %p75 = por %p73, %p74
      %p76 = scmp.ne.s32.totalorder %s65, %s66
      %p77 = scmp.eq.s32.totalorder %s36, 0
      %p78 = por %p76, %p77
      %p79 = scmp.ne.s32.totalorder %s65, %s66
      %p80 = scmp.eq.s32.totalorder %s37, 1
      %p81 = por %p79, %p80
      %p83 = scmp.ne.s32.totalorder %s66, %s82
      %p84 = scmp.eq.s32.totalorder %s37, 0
      %p85 = por %p83, %p84
      %s87 = sadd.s32 %s86, 1
      %p90 = scmp.eq.s32.totalorder %s31, 1
      %p91 = scmp.ne.s32.totalorder %s86, %s88
      %p92 = scmp.eq.s32.totalorder %s31, 0
      %p93 = por %p91, %p92
      %p94 = scmp.ne.s32.totalorder %s86, %s88
      %p95 = scmp.eq.s32.totalorder %s36, 1
      %p96 = por %p94, %p95
      %p97 = scmp.ne.s32.totalorder %s88, %s89
      %p98 = scmp.eq.s32.totalorder %s36, 0
      %p99 = por %p97, %p98
      %p100 = scmp.ne.s32.totalorder %s88, %s89
      %p101 = scmp.eq.s32.totalorder %s37, 1
      %p102 = por %p100, %p101
      %p104 = scmp.ne.s32.totalorder %s89, %s103
      %p105 = scmp.eq.s32.totalorder %s37, 0
      %p106 = por %p104, %p105
      %s108 = sadd.s32 %s107, 1
      %p111 = scmp.eq.s32.totalorder %s31, 1
      %p112 = scmp.ne.s32.totalorder %s107, %s109
      %p113 = scmp.eq.s32.totalorder %s31, 0
      %p114 = por %p112, %p113
      %p115 = scmp.ne.s32.totalorder %s107, %s109
      %p116 = scmp.eq.s32.totalorder %s36, 1
      %p117 = por %p115, %p116
      %p118 = scmp.ne.s32.totalorder %s109, %s110
      %p119 = scmp.eq.s32.totalorder %s36, 0
      %p120 = por %p118, %p119
      %p121 = scmp.ne.s32.totalorder %s109, %s110
      %p122 = scmp.eq.s32.totalorder %s37, 1
      %p123 = por %p121, %p122
      %p125 = scmp.ne.s32.totalorder %s110, %s124
      %p126 = scmp.eq.s32.totalorder %s37, 0
      %p127 = por %p125, %p126
      %s129 = sadd.s32 %s128, 1
      %p132 = scmp.eq.s32.totalorder %s31, 1
      %p133 = scmp.ne.s32.totalorder %s128, %s130
      %p134 = scmp.eq.s32.totalorder %s31, 0
      %p135 = por %p133, %p134
      %p136 = scmp.ne.s32.totalorder %s128, %s130
      %p137 = scmp.eq.s32.totalorder %s36, 1
      %p138 = por %p136, %p137
      %p139 = scmp.ne.s32.totalorder %s130, %s131
      %p140 = scmp.eq.s32.totalorder %s36, 0
      %p141 = por %p139, %p140
      %p142 = scmp.ne.s32.totalorder %s130, %s131
      %p143 = scmp.eq.s32.totalorder %s37, 1
      %p144 = por %p142, %p143
      %p146 = scmp.ne.s32.totalorder %s131, %s145
      %p147 = scmp.eq.s32.totalorder %s37, 0
      %p148 = por %p146, %p147
      %s150 = sadd.s32 %s149, 1
      %p153 = scmp.eq.s32.totalorder %s31, 1
      %p154 = scmp.ne.s32.totalorder %s149, %s151
      %p155 = scmp.eq.s32.totalorder %s31, 0
      %p156 = por %p154, %p155
      %p157 = scmp.ne.s32.totalorder %s149, %s151
      %p158 = scmp.eq.s32.totalorder %s36, 1
      %p159 = por %p157, %p158
      %p160 = scmp.ne.s32.totalorder %s151, %s152
      %p161 = scmp.eq.s32.totalorder %s36, 0
      %p162 = por %p160, %p161
      %p163 = scmp.ne.s32.totalorder %s151, %s152
      %p164 = scmp.eq.s32.totalorder %s37, 1
      %p165 = por %p163, %p164
      %p167 = scmp.ne.s32.totalorder %s152, %s166
      %p168 = scmp.eq.s32.totalorder %s37, 0
      %p169 = por %p167, %p168
      %s171 = sadd.s32 %s170, 1
      %p174 = scmp.eq.s32.totalorder %s31, 1
      %p175 = scmp.ne.s32.totalorder %s170, %s172
      %p176 = scmp.eq.s32.totalorder %s31, 0
      %p177 = por %p175, %p176
      %p178 = scmp.ne.s32.totalorder %s170, %s172
      %p179 = scmp.eq.s32.totalorder %s36, 1
      %p180 = por %p178, %p179
      %p181 = scmp.ne.s32.totalorder %s172, %s173
      %p182 = scmp.eq.s32.totalorder %s36, 0
      %p183 = por %p181, %p182
      %p184 = scmp.ne.s32.totalorder %s172, %s173
      %p185 = scmp.eq.s32.totalorder %s37, 1
      %p186 = por %p184, %p185
      %p188 = scmp.ne.s32.totalorder %s173, %s187
      %p189 = scmp.eq.s32.totalorder %s37, 0
      %p190 = por %p188, %p189
      %s192 = sadd.s32 %s191, 1
      %p195 = scmp.eq.s32.totalorder %s31, 1
      %p196 = scmp.ne.s32.totalorder %s191, %s193
      %p197 = scmp.eq.s32.totalorder %s31, 0
      %p198 = por %p196, %p197
      %p199 = scmp.ne.s32.totalorder %s191, %s193
      %p200 = scmp.eq.s32.totalorder %s36, 1
      %p201 = por %p199, %p200
      %p202 = scmp.ne.s32.totalorder %s193, %s194
      %p203 = scmp.eq.s32.totalorder %s36, 0
      %p204 = por %p202, %p203
      %p205 = scmp.ne.s32.totalorder %s193, %s194
      %p206 = scmp.eq.s32.totalorder %s37, 1
      %p207 = por %p205, %p206
      %p209 = scmp.ne.s32.totalorder %s194, %s208
      %p210 = scmp.eq.s32.totalorder %s37, 0
      %p211 = por %p209, %p210
      %s213 = sadd.s32 %s212, 1
      %p216 = scmp.eq.s32.totalorder %s31, 1
      %p217 = scmp.ne.s32.totalorder %s212, %s214
      %p218 = scmp.eq.s32.totalorder %s31, 0
      %p219 = por %p217, %p218
      %p220 = scmp.ne.s32.totalorder %s212, %s214
      %p221 = scmp.eq.s32.totalorder %s36, 1
      %p222 = por %p220, %p221
      %p223 = scmp.ne.s32.totalorder %s214, %s215
      %p224 = scmp.eq.s32.totalorder %s36, 0
      %p225 = por %p223, %p224
      %p226 = scmp.ne.s32.totalorder %s214, %s215
      %p227 = scmp.eq.s32.totalorder %s37, 1
      %p228 = por %p226, %p227
      %p230 = scmp.ne.s32.totalorder %s215, %s229
      %p231 = scmp.eq.s32.totalorder %s37, 0
      %p232 = por %p230, %p231
      %s234 = sadd.s32 %s233, 1
      %p237 = scmp.eq.s32.totalorder %s31, 1
      %p238 = scmp.ne.s32.totalorder %s233, %s235
      %p239 = scmp.eq.s32.totalorder %s31, 0
      %p240 = por %p238, %p239
      %p241 = scmp.ne.s32.totalorder %s233, %s235
      %p242 = scmp.eq.s32.totalorder %s36, 1
      %p243 = por %p241, %p242
      %p244 = scmp.ne.s32.totalorder %s235, %s236
      %p245 = scmp.eq.s32.totalorder %s36, 0
      %p246 = por %p244, %p245
      %p247 = scmp.ne.s32.totalorder %s235, %s236
      %p248 = scmp.eq.s32.totalorder %s37, 1
      %p249 = por %p247, %p248
      %p251 = scmp.ne.s32.totalorder %s236, %s250
      %p252 = scmp.eq.s32.totalorder %s37, 0
      %p253 = por %p251, %p252
      %s255 = sadd.s32 %s254, 1
      %p258 = scmp.eq.s32.totalorder %s31, 1
      %p259 = scmp.ne.s32.totalorder %s254, %s256
      %p260 = scmp.eq.s32.totalorder %s31, 0
      %p261 = por %p259, %p260
      %p262 = scmp.ne.s32.totalorder %s254, %s256
      %p263 = scmp.eq.s32.totalorder %s36, 1
      %p264 = por %p262, %p263
      %p265 = scmp.ne.s32.totalorder %s256, %s257
      %p266 = scmp.eq.s32.totalorder %s36, 0
      %p267 = por %p265, %p266
      %p268 = scmp.ne.s32.totalorder %s256, %s257
      %p269 = scmp.eq.s32.totalorder %s37, 1
      %p270 = por %p268, %p269
      %p272 = scmp.ne.s32.totalorder %s257, %s271
      %p273 = scmp.eq.s32.totalorder %s37, 0
      %p274 = por %p272, %p273
      %s276 = sadd.s32 %s275, 1
      %p279 = scmp.eq.s32.totalorder %s31, 1
      %p280 = scmp.ne.s32.totalorder %s275, %s277
      %p281 = scmp.eq.s32.totalorder %s31, 0
      %p282 = por %p280, %p281
      %p283 = scmp.ne.s32.totalorder %s275, %s277
      %p284 = scmp.eq.s32.totalorder %s36, 1
      %p285 = por %p283, %p284
      %p286 = scmp.ne.s32.totalorder %s277, %s278
      %p287 = scmp.eq.s32.totalorder %s36, 0
      %p288 = por %p286, %p287
      %p289 = scmp.ne.s32.totalorder %s277, %s278
      %p290 = scmp.eq.s32.totalorder %s37, 1
      %p291 = por %p289, %p290
      %p293 = scmp.ne.s32.totalorder %s278, %s292
      %p294 = scmp.eq.s32.totalorder %s37, 0
      %p295 = por %p293, %p294
      %s297 = sadd.s32 %s296, 1
      %p300 = scmp.eq.s32.totalorder %s31, 1
      %p301 = scmp.ne.s32.totalorder %s296, %s298
      %p302 = scmp.eq.s32.totalorder %s31, 0
      %p303 = por %p301, %p302
      %p304 = scmp.ne.s32.totalorder %s296, %s298
      %p305 = scmp.eq.s32.totalorder %s36, 1
      %p306 = por %p304, %p305
      %p307 = scmp.ne.s32.totalorder %s298, %s299
      %p308 = scmp.eq.s32.totalorder %s36, 0
      %p309 = por %p307, %p308
      %p310 = scmp.ne.s32.totalorder %s298, %s299
      %p311 = scmp.eq.s32.totalorder %s37, 1
      %p312 = por %p310, %p311
      %p314 = scmp.ne.s32.totalorder %s299, %s313
      %p315 = scmp.eq.s32.totalorder %s37, 0
      %p316 = por %p314, %p315
      %s318 = sadd.s32 %s317, 1
      %p321 = scmp.eq.s32.totalorder %s31, 1
      %p322 = scmp.ne.s32.totalorder %s317, %s319
      %p323 = scmp.eq.s32.totalorder %s31, 0
      %p324 = por %p322, %p323
      %p325 = scmp.ne.s32.totalorder %s317, %s319
      %p326 = scmp.eq.s32.totalorder %s36, 1
      %p327 = por %p325, %p326
      %p328 = scmp.ne.s32.totalorder %s319, %s320
      %p329 = scmp.eq.s32.totalorder %s36, 0
      %p330 = por %p328, %p329
      %p331 = scmp.ne.s32.totalorder %s319, %s320
      %p332 = scmp.eq.s32.totalorder %s37, 1
      %p333 = por %p331, %p332
      %p335 = scmp.ne.s32.totalorder %s320, %s334
      %p336 = scmp.eq.s32.totalorder %s37, 0
      %p337 = por %p335, %p336
      %s339 = sadd.s32 %s338, 1
      %p342 = scmp.eq.s32.totalorder %s31, 1
      %p343 = scmp.ne.s32.totalorder %s338, %s340
      %p344 = scmp.eq.s32.totalorder %s31, 0
      %p345 = por %p343, %p344
      %p346 = scmp.ne.s32.totalorder %s338, %s340
      %p347 = scmp.eq.s32.totalorder %s36, 1
      %p348 = por %p346, %p347
      %p349 = scmp.ne.s32.totalorder %s340, %s341
      %p350 = scmp.eq.s32.totalorder %s36, 0
      %p351 = por %p349, %p350
      %p352 = scmp.ne.s32.totalorder %s340, %s341
      %p353 = scmp.eq.s32.totalorder %s37, 1
      %p354 = por %p352, %p353
      %p356 = scmp.ne.s32.totalorder %s341, %s355
      %p357 = scmp.eq.s32.totalorder %s37, 0
      %p358 = por %p356, %p357
      %s360 = sadd.s32 %s359, 1
      %p363 = scmp.eq.s32.totalorder %s31, 1
      %p364 = scmp.ne.s32.totalorder %s359, %s361
      %p365 = scmp.eq.s32.totalorder %s31, 0
      %p366 = por %p364, %p365
      %p367 = scmp.ne.s32.totalorder %s359, %s361
      %p368 = scmp.eq.s32.totalorder %s36, 1
      %p369 = por %p367, %p368
      %p370 = scmp.ne.s32.totalorder %s361, %s362
      %p371 = scmp.eq.s32.totalorder %s36, 0
      %p372 = por %p370, %p371
      %p373 = scmp.ne.s32.totalorder %s361, %s362
      %p374 = scmp.eq.s32.totalorder %s37, 1
      %p375 = por %p373, %p374
      %p377 = scmp.ne.s32.totalorder %s362, %s376
      %p378 = scmp.eq.s32.totalorder %s37, 0
      %p379 = por %p377, %p378
      %s380 = ssub.s32 %s31, %s38
      %p381 = scmp.eq.s32.totalorder %s380, 0
      %s383 = sadd.s32 %s382, 1
      %s384 = scalar_select %p381, %s382, %s383
      %p387 = pneg %p381
      %p388 = scmp.eq.s32.totalorder %s31, 1
      %p389 = por %p387, %p388
      %p390 = scmp.ne.s32.totalorder %s382, %s385
      %p391 = scmp.eq.s32.totalorder %s31, 0
      %p392 = por %p390, %p391
      %p393 = scmp.ne.s32.totalorder %s382, %s385
      %p394 = scmp.eq.s32.totalorder %s36, 1
      %p395 = por %p393, %p394
      %p396 = scmp.ne.s32.totalorder %s385, %s386
      %p397 = scmp.eq.s32.totalorder %s36, 0
      %p398 = por %p396, %p397
      %p399 = scmp.ne.s32.totalorder %s385, %s386
      %p400 = scmp.eq.s32.totalorder %s37, 1
      %p401 = por %p399, %p400
      %p403 = scmp.ne.s32.totalorder %s386, %s402
      %p404 = scmp.eq.s32.totalorder %s37, 0
      %p405 = por %p403, %p404
      %p406 = scmp.le.s32.totalorder 1, %s31
      %p407 = scmp.lt.s32.totalorder %s31, 3
      %p408 = pnand %p406, %p407
      %p409 = pneg %p408
      // Predicated region
      $region9: #{tpu_custom_call.1} parent=5 // pred_check
        _
      $region10: #{tpu_custom_call.1} parent=5 // pred_check_branch
        %411 = sbr.rel (%p408) target = $region12
      $region11: #{tpu_custom_call.1} parent=5 // pred_region
        %s412 = ssub.s32 %s31, 1
        // Predicated region
        $region13: #{tpu_custom_call.1} parent=11 // pred_check
          %p413 = pneg %p52
        $region14: #{tpu_custom_call.1} parent=11 // pred_check_branch
          %415 = sbr.rel (%p413) target = $region16
        $region15: #{tpu_custom_call.1} parent=11 // pred_region
          %417 = vsyncadd [#allocation3], 0
          %s418 = sshll.u32 %s0, 4
          %s419 = int_to_ptr.hbm [resolvable:$true] %s418
          %s420 = sshll.u32 [#allocation2], 4
          %s421 = int_to_ptr.vmem [resolvable:$true] %s420
          %426 = dma.hbm_to_vmem [thread:$0]  %s419, 256, %s421, [#allocation3], 128, 128, 8
        $region16: #{tpu_custom_call.1} parent=11 // pred_fallthru
          _
        // Predicated region
        $region17: #{tpu_custom_call.1} parent=11 // pred_check
          %p427 = pneg %p99
        $region18: #{tpu_custom_call.1} parent=11 // pred_check_branch
          %429 = sbr.rel (%p427) target = $region20
        $region19: #{tpu_custom_call.1} parent=11 // pred_region
          %431 = vsyncadd [#allocation6], 0
          %s432 = sshll.u32 %s2, 4
          %s433 = int_to_ptr.hbm [resolvable:$true] %s432
          %s434 = sshll.u32 [#allocation7], 4
          %s435 = int_to_ptr.vmem [resolvable:$true] %s434
          %440 = dma.hbm_to_vmem [thread:$0]  %s433, 2048, %s435, [#allocation6], 128, 128, 8
        $region20: #{tpu_custom_call.1} parent=11 // pred_fallthru
          _
        // Predicated region
        $region21: #{tpu_custom_call.1} parent=11 // pred_check
          %p441 = pneg %p120
        $region22: #{tpu_custom_call.1} parent=11 // pred_check_branch
          %443 = sbr.rel (%p441) target = $region24
        $region23: #{tpu_custom_call.1} parent=11 // pred_region
          _
        $region24: #{tpu_custom_call.1} parent=11 // pred_fallthru
          _
        // Predicated region
        $region25: #{tpu_custom_call.1} parent=11 // pred_check
          %p444 = pneg %p141
        $region26: #{tpu_custom_call.1} parent=11 // pred_check_branch
          %446 = sbr.rel (%p444) target = $region28
        $region27: #{tpu_custom_call.1} parent=11 // pred_region
          %448 = vsyncadd [#allocation9], 0
          %s449 = sshll.u32 %s4, 4
          %s450 = int_to_ptr.hbm [resolvable:$true] %s449
          %s451 = sshll.u32 [#allocation8], 4
          %s452 = int_to_ptr.vmem [resolvable:$true] %s451
          %457 = dma.hbm_to_vmem [thread:$0]  %s450, 2048, %s452, [#allocation9], 128, 128, 8
        $region28: #{tpu_custom_call.1} parent=11 // pred_fallthru
          _
        // Predicated region
        $region29: #{tpu_custom_call.1} parent=11 // pred_check
          %p458 = pneg %p162
        $region30: #{tpu_custom_call.1} parent=11 // pred_check_branch
          %460 = sbr.rel (%p458) target = $region32
        $region31: #{tpu_custom_call.1} parent=11 // pred_region
          _
        $region32: #{tpu_custom_call.1} parent=11 // pred_fallthru
          _
        // Predicated region
        $region33: #{tpu_custom_call.1} parent=11 // pred_check
          %p461 = pneg %p183
        $region34: #{tpu_custom_call.1} parent=11 // pred_check_branch
          %463 = sbr.rel (%p461) target = $region36
        $region35: #{tpu_custom_call.1} parent=11 // pred_region
          %465 = vsyncadd [#allocation9], 0
          %s466 = sshll.u32 %s6, 4
          %s467 = int_to_ptr.hbm [resolvable:$true] %s466
          %s468 = sshll.u32 [#allocation10], 4
          %s469 = int_to_ptr.vmem [resolvable:$true] %s468
          %474 = dma.hbm_to_vmem [thread:$0]  %s467, 2048, %s469, [#allocation9], 128, 128, 8
        $region36: #{tpu_custom_call.1} parent=11 // pred_fallthru
          _
        // Predicated region
        $region37: #{tpu_custom_call.1} parent=11 // pred_check
          %p475 = pneg %p204
        $region38: #{tpu_custom_call.1} parent=11 // pred_check_branch
          %477 = sbr.rel (%p475) target = $region40
        $region39: #{tpu_custom_call.1} parent=11 // pred_region
          _
        $region40: #{tpu_custom_call.1} parent=11 // pred_fallthru
          _
        // Predicated region
        $region41: #{tpu_custom_call.1} parent=11 // pred_check
          %p478 = pneg %p225
        $region42: #{tpu_custom_call.1} parent=11 // pred_check_branch
          %480 = sbr.rel (%p478) target = $region44
        $region43: #{tpu_custom_call.1} parent=11 // pred_region
          _
        $region44: #{tpu_custom_call.1} parent=11 // pred_fallthru
          _
        // Predicated region
        $region45: #{tpu_custom_call.1} parent=11 // pred_check
          %p481 = pneg %p246
        $region46: #{tpu_custom_call.1} parent=11 // pred_check_branch
          %483 = sbr.rel (%p481) target = $region48
        $region47: #{tpu_custom_call.1} parent=11 // pred_region
          _
        $region48: #{tpu_custom_call.1} parent=11 // pred_fallthru
          _
        // Predicated region
        $region49: #{tpu_custom_call.1} parent=11 // pred_check
          %p484 = pneg %p267
        $region50: #{tpu_custom_call.1} parent=11 // pred_check_branch
          %486 = sbr.rel (%p484) target = $region52
        $region51: #{tpu_custom_call.1} parent=11 // pred_region
          _
        $region52: #{tpu_custom_call.1} parent=11 // pred_fallthru
          _
        // Predicated region
        $region53: #{tpu_custom_call.1} parent=11 // pred_check
          %p487 = pneg %p288
        $region54: #{tpu_custom_call.1} parent=11 // pred_check_branch
          %489 = sbr.rel (%p487) target = $region56
        $region55: #{tpu_custom_call.1} parent=11 // pred_region
          _
        $region56: #{tpu_custom_call.1} parent=11 // pred_fallthru
          _
        // Predicated region
        $region57: #{tpu_custom_call.1} parent=11 // pred_check
          %p490 = pneg %p309
        $region58: #{tpu_custom_call.1} parent=11 // pred_check_branch
          %492 = sbr.rel (%p490) target = $region60
        $region59: #{tpu_custom_call.1} parent=11 // pred_region
          %494 = vsyncadd [#allocation12], 0
          %s495 = sshll.u32 %s12, 4
          %s496 = int_to_ptr.hbm [resolvable:$true] %s495
          %s497 = sshll.u32 [#allocation11], 4
          %s498 = int_to_ptr.vmem [resolvable:$true] %s497
          %503 = dma.hbm_to_vmem [thread:$0]  %s496, 2048, %s498, [#allocation12], 128, 128, 8
        $region60: #{tpu_custom_call.1} parent=11 // pred_fallthru
          _
        // Predicated region
        $region61: #{tpu_custom_call.1} parent=11 // pred_check
          %p504 = pneg %p330
        $region62: #{tpu_custom_call.1} parent=11 // pred_check_branch
          %506 = sbr.rel (%p504) target = $region64
        $region63: #{tpu_custom_call.1} parent=11 // pred_region
          _
        $region64: #{tpu_custom_call.1} parent=11 // pred_fallthru
          _
        // Predicated region
        $region65: #{tpu_custom_call.1} parent=11 // pred_check
          %p507 = pneg %p351
        $region66: #{tpu_custom_call.1} parent=11 // pred_check_branch
          %509 = sbr.rel (%p507) target = $region68
        $region67: #{tpu_custom_call.1} parent=11 // pred_region
          %511 = vsyncadd [#allocation12], 0
          %s512 = sshll.u32 %s14, 4
          %s513 = int_to_ptr.hbm [resolvable:$true] %s512
          %s514 = sshll.u32 [#allocation13], 4
          %s515 = int_to_ptr.vmem [resolvable:$true] %s514
          %520 = dma.hbm_to_vmem [thread:$0]  %s513, 2048, %s515, [#allocation12], 128, 128, 8
        $region68: #{tpu_custom_call.1} parent=11 // pred_fallthru
          _
        // Predicated region
        $region69: #{tpu_custom_call.1} parent=11 // pred_check
          %p521 = pneg %p372
        $region70: #{tpu_custom_call.1} parent=11 // pred_check_branch
          %523 = sbr.rel (%p521) target = $region72
        $region71: #{tpu_custom_call.1} parent=11 // pred_region
          _
        $region72: #{tpu_custom_call.1} parent=11 // pred_fallthru
          _
      $region12: #{tpu_custom_call.1} parent=5 // pred_fallthru
        _
      %p524 = scmp.lt.s32.totalorder %s31, 2
      // Predicated region
      $region73: #{tpu_custom_call.1} parent=5 // pred_check
        %p525 = pneg %p524
      $region74: #{tpu_custom_call.1} parent=5 // pred_check_branch
        %527 = sbr.rel (%p525) target = $region76
      $region75: #{tpu_custom_call.1} parent=5 // pred_region
        // Predicated region
        $region77: #{tpu_custom_call.1} parent=75 // pred_check
          %p528 = pneg %p72
        $region78: #{tpu_custom_call.1} parent=75 // pred_check_branch
          %530 = sbr.rel (%p528) target = $region80
        $region79: #{tpu_custom_call.1} parent=75 // pred_region
          %s531 = sand.u32 %s31, 1
          %s532 = scalar_lea.sflag [#allocation6], %s531
          %s533 = sand.u32 %s62, 1
          %s534 = smul.addr %s533, 8
          %s535 = scalar_lea.vmem [#allocation5], %s534
          %537 = vsyncadd %s532, 0
          %s538 = smul.addr %s31, 8
          %s539 = scalar_lea.hbm %s1, %s538
          %s541 = sshll.u32 %s539, 4
          %s542 = int_to_ptr.hbm [resolvable:$true] %s541
          %s543 = sshll.u32 %s535, 4
          %s544 = int_to_ptr.vmem [resolvable:$true] %s543
          %546 = dma.hbm_to_vmem [thread:$0]  %s542, 128, %s544, %s532
        $region80: #{tpu_custom_call.1} parent=75 // pred_fallthru
          _
      $region76: #{tpu_custom_call.1} parent=5 // pred_fallthru
        _
      %p547 = scmp.le.s32.totalorder 1, %s31
      %p548 = scmp.lt.s32.totalorder %s31, 3
      %p549 = pnand %p547, %p548
      %p550 = pneg %p549
      // Predicated region
      $region81: #{tpu_custom_call.1} parent=5 // pred_check
        _
      $region82: #{tpu_custom_call.1} parent=5 // pred_check_branch
        %552 = sbr.rel (%p549) target = $region84
      $region83: #{tpu_custom_call.1} parent=5 // pred_region
        %s553 = ssub.s32 %s31, 1
        // Predicated region
        $region85: #{tpu_custom_call.1} parent=83 // pred_check
          %p554 = pneg %p52
        $region86: #{tpu_custom_call.1} parent=83 // pred_check_branch
          %556 = sbr.rel (%p554) target = $region88
        $region87: #{tpu_custom_call.1} parent=83 // pred_region
          %558 = dma.done [#allocation3], 256
        $region88: #{tpu_custom_call.1} parent=83 // pred_fallthru
          _
        %s559 = sand.u32 %s36, 1
        %s560 = scalar_lea.sflag [#allocation6], %s559
        %s561 = sand.u32 %s65, 1
        %s562 = smul.addr %s561, 8
        %s563 = scalar_lea.vmem [#allocation5], %s562
        // Predicated region
        $region89: #{tpu_custom_call.1} parent=83 // pred_check
          %p564 = pneg %p78
        $region90: #{tpu_custom_call.1} parent=83 // pred_check_branch
          %566 = sbr.rel (%p564) target = $region92
        $region91: #{tpu_custom_call.1} parent=83 // pred_region
          %568 = dma.done %s560, 128
        $region92: #{tpu_custom_call.1} parent=83 // pred_fallthru
          _
        // Predicated region
        $region93: #{tpu_custom_call.1} parent=83 // pred_check
          %p569 = pneg %p99
        $region94: #{tpu_custom_call.1} parent=83 // pred_check_branch
          %571 = sbr.rel (%p569) target = $region96
        $region95: #{tpu_custom_call.1} parent=83 // pred_region
          %573 = dma.done [#allocation6], 2048
        $region96: #{tpu_custom_call.1} parent=83 // pred_fallthru
          _
        // Predicated region
        $region97: #{tpu_custom_call.1} parent=83 // pred_check
          %p574 = pneg %p141
        $region98: #{tpu_custom_call.1} parent=83 // pred_check_branch
          %576 = sbr.rel (%p574) target = $region100
        $region99: #{tpu_custom_call.1} parent=83 // pred_region
          %578 = dma.done [#allocation9], 2048
        $region100: #{tpu_custom_call.1} parent=83 // pred_fallthru
          _
        // Predicated region
        $region101: #{tpu_custom_call.1} parent=83 // pred_check
          %p579 = pneg %p183
        $region102: #{tpu_custom_call.1} parent=83 // pred_check_branch
          %581 = sbr.rel (%p579) target = $region104
        $region103: #{tpu_custom_call.1} parent=83 // pred_region
          %583 = dma.done [#allocation9], 2048
        $region104: #{tpu_custom_call.1} parent=83 // pred_fallthru
          _
        // Predicated region
        $region105: #{tpu_custom_call.1} parent=83 // pred_check
          %p584 = pneg %p309
        $region106: #{tpu_custom_call.1} parent=83 // pred_check_branch
          %586 = sbr.rel (%p584) target = $region108
        $region107: #{tpu_custom_call.1} parent=83 // pred_region
          %588 = dma.done [#allocation12], 2048
        $region108: #{tpu_custom_call.1} parent=83 // pred_fallthru
          _
        // Predicated region
        $region109: #{tpu_custom_call.1} parent=83 // pred_check
          %p589 = pneg %p351
        $region110: #{tpu_custom_call.1} parent=83 // pred_check_branch
          %591 = sbr.rel (%p589) target = $region112
        $region111: #{tpu_custom_call.1} parent=83 // pred_region
          %593 = dma.done [#allocation12], 2048
        $region112: #{tpu_custom_call.1} parent=83 // pred_fallthru
          _
        %p594 = pneg %p52
        %p595 = pneg %p49
        %s596 = sand.u32 %s36, 1
        %s597 = scalar_lea.sflag [#allocation6], %s596
        %s598 = sand.u32 %s65, 1
        %s599 = smul.addr %s598, 8
        %s600 = scalar_lea.vmem [#allocation5], %s599
        %p601 = pneg %p78
        %p602 = pneg %p75
        %p603 = pneg %p99
        %p604 = pneg %p96
        %p605 = pneg %p120
        %p606 = pneg %p117
        %p607 = pneg %p141
        %p608 = pneg %p138
        %p609 = pneg %p162
        %p610 = pneg %p159
        %p611 = pneg %p183
        %p612 = pneg %p180
        %p613 = pneg %p204
        %p614 = pneg %p201
        %p615 = pneg %p225
        %p616 = pneg %p222
        %p617 = pneg %p246
        %p618 = pneg %p243
        %p619 = pneg %p267
        %p620 = pneg %p264
        %p621 = pneg %p288
        %p622 = pneg %p285
        %p623 = pneg %p309
        %p624 = pneg %p306
        %p625 = pneg %p330
        %p626 = pneg %p327
        %p627 = pneg %p351
        %p628 = pneg %p348
        %p629 = pneg %p372
        %p630 = pneg %p369
        %p631 = pneg %p398
        %p632 = pneg %p395
        %s633 = sand.u32 %s385, 1
        %s634 = scalar_lea.sflag [#allocation4], %s633
        %s635 = sand.u32 %s385, 1
        %s636 = smul.addr %s635, 16
        %s637 = scalar_lea.vmem [#allocation14], %s636
        %s638 = smul.u32 %s36, 8
        %s639 = scalar_lea.vmem [#allocation2], %s638
        %v640 = vld [vmem:[%s639] sm:$0xff]
        %v641 = vld [vmem:[%s8] sm:$0x1]
        %v642 = vld [vmem:[%s9] sm:$0x1]
        %643 = vadd.xlane.f32.xlu0 %v640
        %v644 = vpop.xlane.xlu0 %643
        %v645 = vrcp.pop 128.0
        %v646 = vmul.f32 128.0, %v645
        %v647 = vsub.f32 1.0, %v646
        %v648 = vmul.f32 %v645, %v647
        %v649 = vadd.f32 %v645, %v648
        %vm650 = vweird.f32 %v645
        %v651 = vsel %vm650, %v645, %v649
        %v652 = vmul.f32 %v644, %v651
        %v653 = vsub.f32 %v640, %v652
        %v654 = vmul.f32 %v653, %v653
        %655 = vadd.xlane.f32.xlu0 %v654
        %v656 = vpop.xlane.xlu0 %655
        %v657 = vmul.f32 %v656, %v651
        %v658 = vadd.f32 %v657, 1e-05
        %v659 = vrsqrt.pop %v658
        %v660 = vmul.f32 %v659, %v658
        %v661 = vmul.f32 %v660, %v659
        %v662 = vmul.f32 0.5, %v661
        %v663 = vsub.f32 1.5, %v662
        %v664 = vmul.f32 %v659, %v663
        %vm665 = vweird.f32 %v658
        %vm666 = vweird.f32 %v659
        %vm667 = vmor %vm665, %vm666
        %v668 = vsel %vm667, %v659, %v664
        %v669 = vmul.f32 %v653, %v668
        %v671 = vperm.slane %v641, 0
        %v673 = vmul.f32 %v669, %v671
        %v675 = vperm.slane %v642, 0
        %v677 = vadd.f32 %v673, %v675
        %v678 = vld [vmem:[#allocation7] sm:$0xff]
        %v679 = vld [vmem:[#allocation7 + $0x8] sm:$0xff]
        %v680 = vld [vmem:[#allocation7 + $0x10] sm:$0xff]
        %v681 = vld [vmem:[#allocation7 + $0x18] sm:$0xff]
        %v682 = vld [vmem:[#allocation7 + $0x20] sm:$0xff]
        %v683 = vld [vmem:[#allocation7 + $0x28] sm:$0xff]
        %v684 = vld [vmem:[#allocation7 + $0x30] sm:$0xff]
        %v685 = vld [vmem:[#allocation7 + $0x38] sm:$0xff]
        %v686 = vld [vmem:[#allocation7 + $0x40] sm:$0xff]
        %v687 = vld [vmem:[#allocation7 + $0x48] sm:$0xff]
        %v688 = vld [vmem:[#allocation7 + $0x50] sm:$0xff]
        %v689 = vld [vmem:[#allocation7 + $0x58] sm:$0xff]
        %v690 = vld [vmem:[#allocation7 + $0x60] sm:$0xff]
        %v691 = vld [vmem:[#allocation7 + $0x68] sm:$0xff]
        %v692 = vld [vmem:[#allocation7 + $0x70] sm:$0xff]
        %v693 = vld [vmem:[#allocation7 + $0x78] sm:$0xff]
        %v694 = vld [vmem:[%s3] sm:$0x1]
        %v696 = vperm.slane %v694, 0
        %698 = vmatpush.msra.mxu0 %v693
        %699 = vmatpush.msra.mxu0 %v692
        %700 = vmatpush.msra.mxu0 %v691
        %701 = vmatpush.msra.mxu0 %v690
        %702 = vmatpush.msra.mxu0 %v689
        %703 = vmatpush.msra.mxu0 %v688
        %704 = vmatpush.msra.mxu0 %v687
        %705 = vmatpush.msra.mxu0 %v686
        %706 = vmatpush.msra.mxu0 %v685
        %707 = vmatpush.msra.mxu0 %v684
        %708 = vmatpush.msra.mxu0 %v683
        %709 = vmatpush.msra.mxu0 %v682
        %710 = vmatpush.msra.mxu0 %v681
        %711 = vmatpush.msra.mxu0 %v680
        %712 = vmatpush.msra.mxu0 %v679
        %713 = vmatpush.msra.mxu0 %v678
        %714 = vmatmul.f32.gmra.mxu0 %v677
        %v715 = vpop.f32.mrf.mxu0
        %v716 = vadd.f32 %v696, %v715
        %717 = vdwg.mxu0
        %v718 = vld [vmem:[#allocation8] sm:$0xff]
        %v719 = vld [vmem:[#allocation8 + $0x8] sm:$0xff]
        %v720 = vld [vmem:[#allocation8 + $0x10] sm:$0xff]
        %v721 = vld [vmem:[#allocation8 + $0x18] sm:$0xff]
        %v722 = vld [vmem:[#allocation8 + $0x20] sm:$0xff]
        %v723 = vld [vmem:[#allocation8 + $0x28] sm:$0xff]
        %v724 = vld [vmem:[#allocation8 + $0x30] sm:$0xff]
        %v725 = vld [vmem:[#allocation8 + $0x38] sm:$0xff]
        %v726 = vld [vmem:[#allocation8 + $0x40] sm:$0xff]
        %v727 = vld [vmem:[#allocation8 + $0x48] sm:$0xff]
        %v728 = vld [vmem:[#allocation8 + $0x50] sm:$0xff]
        %v729 = vld [vmem:[#allocation8 + $0x58] sm:$0xff]
        %v730 = vld [vmem:[#allocation8 + $0x60] sm:$0xff]
        %v731 = vld [vmem:[#allocation8 + $0x68] sm:$0xff]
        %v732 = vld [vmem:[#allocation8 + $0x70] sm:$0xff]
        %v733 = vld [vmem:[#allocation8 + $0x78] sm:$0xff]
        %v734 = vld [vmem:[%s5] sm:$0x1]
        %v736 = vperm.slane %v734, 0
        %738 = vmatpush.msra.mxu0 %v733
        %739 = vmatpush.msra.mxu0 %v732
        %740 = vmatpush.msra.mxu0 %v731
        %741 = vmatpush.msra.mxu0 %v730
        %742 = vmatpush.msra.mxu0 %v729
        %743 = vmatpush.msra.mxu0 %v728
        %744 = vmatpush.msra.mxu0 %v727
        %745 = vmatpush.msra.mxu0 %v726
        %746 = vmatpush.msra.mxu0 %v725
        %747 = vmatpush.msra.mxu0 %v724
        %748 = vmatpush.msra.mxu0 %v723
        %749 = vmatpush.msra.mxu0 %v722
        %750 = vmatpush.msra.mxu0 %v721
        %751 = vmatpush.msra.mxu0 %v720
        %752 = vmatpush.msra.mxu0 %v719
        %753 = vmatpush.msra.mxu0 %v718
        %754 = vmatmul.f32.gmra.mxu0 %v677
        %v755 = vpop.f32.mrf.mxu0
        %v756 = vadd.f32 %v736, %v755
        %757 = vdwg.mxu0
        %v758 = vld [vmem:[#allocation10] sm:$0xff]
        %v759 = vld [vmem:[#allocation10 + $0x8] sm:$0xff]
        %v760 = vld [vmem:[#allocation10 + $0x10] sm:$0xff]
        %v761 = vld [vmem:[#allocation10 + $0x18] sm:$0xff]
        %v762 = vld [vmem:[#allocation10 + $0x20] sm:$0xff]
        %v763 = vld [vmem:[#allocation10 + $0x28] sm:$0xff]
        %v764 = vld [vmem:[#allocation10 + $0x30] sm:$0xff]
        %v765 = vld [vmem:[#allocation10 + $0x38] sm:$0xff]
        %v766 = vld [vmem:[#allocation10 + $0x40] sm:$0xff]
        %v767 = vld [vmem:[#allocation10 + $0x48] sm:$0xff]
        %v768 = vld [vmem:[#allocation10 + $0x50] sm:$0xff]
        %v769 = vld [vmem:[#allocation10 + $0x58] sm:$0xff]
        %v770 = vld [vmem:[#allocation10 + $0x60] sm:$0xff]
        %v771 = vld [vmem:[#allocation10 + $0x68] sm:$0xff]
        %v772 = vld [vmem:[#allocation10 + $0x70] sm:$0xff]
        %v773 = vld [vmem:[#allocation10 + $0x78] sm:$0xff]
        %v774 = vld [vmem:[%s7] sm:$0x1]
        %v776 = vperm.slane %v774, 0
        %778 = vmatpush.msra.mxu0 %v773
        %779 = vmatpush.msra.mxu0 %v772
        %780 = vmatpush.msra.mxu0 %v771
        %781 = vmatpush.msra.mxu0 %v770
        %782 = vmatpush.msra.mxu0 %v769
        %783 = vmatpush.msra.mxu0 %v768
        %784 = vmatpush.msra.mxu0 %v767
        %785 = vmatpush.msra.mxu0 %v766
        %786 = vmatpush.msra.mxu0 %v765
        %787 = vmatpush.msra.mxu0 %v764
        %788 = vmatpush.msra.mxu0 %v763
        %789 = vmatpush.msra.mxu0 %v762
        %790 = vmatpush.msra.mxu0 %v761
        %791 = vmatpush.msra.mxu0 %v760
        %792 = vmatpush.msra.mxu0 %v759
        %793 = vmatpush.msra.mxu0 %v758
        %794 = vmatmul.f32.gmra.mxu0 %v677
        %v795 = vpop.f32.mrf.mxu0
        %v796 = vadd.f32 %v776, %v795
        %797 = vdwg.mxu0
        %v798 = vld [vmem:[%s563] sm:$0xff]
        %799 = vmatpush.xpose.msra.mxu0 0.0
        %800 = vmatpush.xpose.msra.mxu0 0.0
        %801 = vmatpush.xpose.msra.mxu0 0.0
        %802 = vmatpush.xpose.msra.mxu0 0.0
        %803 = vmatpush.xpose.msra.mxu0 0.0
        %804 = vmatpush.xpose.msra.mxu0 0.0
        %805 = vmatpush.xpose.msra.mxu0 0.0
        %806 = vmatpush.xpose.msra.mxu0 0.0
        %807 = vmatpush.xpose.msra.mxu0 0.0
        %808 = vmatpush.xpose.msra.mxu0 0.0
        %809 = vmatpush.xpose.msra.mxu0 0.0
        %810 = vmatpush.xpose.msra.mxu0 0.0
        %811 = vmatpush.xpose.msra.mxu0 0.0
        %812 = vmatpush.xpose.msra.mxu0 0.0
        %813 = vmatpush.xpose.msra.mxu0 0.0
        %814 = vmatpush.xpose.msra.mxu0 %v756
        %815 = vmatmul.f32.gmra.mxu0 %v716
        %v816 = vpop.f32.mrf.mxu0
        %v817 = vadd.f32 %v798, %v816
        %818 = vdwg.mxu0
        %vm819 = vcmask 64512
        %v820 = vsel %vm819, %v817, -inf
        %821 = vmax.xlane.f32.xlu0 %v820
        %v822 = vpop.xlane.xlu0 %821
        %v823 = vsub.f32 %v817, %v822
        %v824 = vmul.f32 %v823, 1.442695
        %v825 = vpow.pop %v824
        %v826 = vsel %vm819, %v825, 0.0
        %827 = vadd.xlane.f32.xlu0 %v826
        %v828 = vpop.xlane.xlu0 %827
        %v829 = vrcp.pop %v828
        %v830 = vmul.f32 %v825, %v829
        %v832 = vsel %vm819, %v830, 0
        %834 = vmatpush.msra.mxu0 0.0
        %835 = vmatpush.msra.mxu0 0.0
        %836 = vmatpush.msra.mxu0 0.0
        %837 = vmatpush.msra.mxu0 0.0
        %838 = vmatpush.msra.mxu0 0.0
        %839 = vmatpush.msra.mxu0 0.0
        %840 = vmatpush.msra.mxu0 0.0
        %841 = vmatpush.msra.mxu0 0.0
        %842 = vmatpush.msra.mxu0 0.0
        %843 = vmatpush.msra.mxu0 0.0
        %844 = vmatpush.msra.mxu0 0.0
        %845 = vmatpush.msra.mxu0 0.0
        %846 = vmatpush.msra.mxu0 0.0
        %847 = vmatpush.msra.mxu0 0.0
        %848 = vmatpush.msra.mxu0 0.0
        %849 = vmatpush.msra.mxu0 %v796
        %850 = vmatmul.f32.gmra.mxu0 %v832
        %v851 = vpop.f32.mrf.mxu0
        %v852 = vadd.f32 0.0, %v851
        %853 = vdwg.mxu0
        %v854 = vld [vmem:[#allocation2] sm:$0xff]
        %v855 = vld [vmem:[#allocation2 + $0x8] sm:$0xff]
        %v856 = vadd.f32 %v854, %v852
        %v857 = vadd.f32 %v855, %v852
        %v858 = vld [vmem:[%s10] sm:$0x1]
        %v859 = vld [vmem:[%s11] sm:$0x1]
        %860 = vadd.xlane.f32.xlu0 %v856
        %v861 = vpop.xlane.xlu0 %860
        %862 = vadd.xlane.f32.xlu0 %v857
        %v863 = vpop.xlane.xlu0 %862
        %v864 = vmul.f32 %v861, %v651
        %v865 = vmul.f32 %v863, %v651
        %v866 = vsub.f32 %v856, %v864
        %v867 = vsub.f32 %v857, %v865
        %v868 = vmul.f32 %v866, %v866
        %v869 = vmul.f32 %v867, %v867
        %870 = vadd.xlane.f32.xlu0 %v868
        %v871 = vpop.xlane.xlu0 %870
        %872 = vadd.xlane.f32.xlu0 %v869
        %v873 = vpop.xlane.xlu0 %872
        %v874 = vmul.f32 %v871, %v651
        %v875 = vmul.f32 %v873, %v651
        %v876 = vadd.f32 %v874, 1e-05
        %v877 = vadd.f32 %v875, 1e-05
        %v878 = vrsqrt.pop %v876
        %v879 = vmul.f32 %v878, %v876
        %v880 = vmul.f32 %v879, %v878
        %v881 = vmul.f32 0.5, %v880
        %v882 = vsub.f32 1.5, %v881
        %v883 = vmul.f32 %v878, %v882
        %vm884 = vweird.f32 %v876
        %vm885 = vweird.f32 %v878
        %vm886 = vmor %vm884, %vm885
        %v887 = vsel %vm886, %v878, %v883
        %v888 = vrsqrt.pop %v877
        %v889 = vmul.f32 %v888, %v877
        %v890 = vmul.f32 %v889, %v888
        %v891 = vmul.f32 0.5, %v890
        %v892 = vsub.f32 1.5, %v891
        %v893 = vmul.f32 %v888, %v892
        %vm894 = vweird.f32 %v877
        %vm895 = vweird.f32 %v888
        %vm896 = vmor %vm894, %vm895
        %v897 = vsel %vm896, %v888, %v893
        %v898 = vmul.f32 %v866, %v887
        %v899 = vmul.f32 %v867, %v897
        %v901 = vperm.slane %v858, 0
        %v903 = vmul.f32 %v898, %v901
        %v904 = vmul.f32 %v899, %v901
        %v906 = vperm.slane %v859, 0
        %v908 = vadd.f32 %v903, %v906
        %v909 = vadd.f32 %v904, %v906
        %v910 = vld [vmem:[#allocation11] sm:$0xff]
        %v911 = vld [vmem:[#allocation11 + $0x8] sm:$0xff]
        %v912 = vld [vmem:[#allocation11 + $0x10] sm:$0xff]
        %v913 = vld [vmem:[#allocation11 + $0x18] sm:$0xff]
        %v914 = vld [vmem:[#allocation11 + $0x20] sm:$0xff]
        %v915 = vld [vmem:[#allocation11 + $0x28] sm:$0xff]
        %v916 = vld [vmem:[#allocation11 + $0x30] sm:$0xff]
        %v917 = vld [vmem:[#allocation11 + $0x38] sm:$0xff]
        %v918 = vld [vmem:[#allocation11 + $0x40] sm:$0xff]
        %v919 = vld [vmem:[#allocation11 + $0x48] sm:$0xff]
        %v920 = vld [vmem:[#allocation11 + $0x50] sm:$0xff]
        %v921 = vld [vmem:[#allocation11 + $0x58] sm:$0xff]
        %v922 = vld [vmem:[#allocation11 + $0x60] sm:$0xff]
        %v923 = vld [vmem:[#allocation11 + $0x68] sm:$0xff]
        %v924 = vld [vmem:[#allocation11 + $0x70] sm:$0xff]
        %v925 = vld [vmem:[#allocation11 + $0x78] sm:$0xff]
        %v926 = vld [vmem:[%s13] sm:$0x1]
        %v928 = vperm.slane %v926, 0
        %930 = vmatpush.msra.mxu0 %v925
        %931 = vmatpush.msra.mxu0 %v924
        %932 = vmatpush.msra.mxu0 %v923
        %933 = vmatpush.msra.mxu0 %v922
        %934 = vmatpush.msra.mxu0 %v921
        %935 = vmatpush.msra.mxu0 %v920
        %936 = vmatpush.msra.mxu0 %v919
        %937 = vmatpush.msra.mxu0 %v918
        %938 = vmatpush.msra.mxu0 %v917
        %939 = vmatpush.msra.mxu0 %v916
        %940 = vmatpush.msra.mxu0 %v915
        %941 = vmatpush.msra.mxu0 %v914
        %942 = vmatpush.msra.mxu0 %v913
        %943 = vmatpush.msra.mxu0 %v912
        %944 = vmatpush.msra.mxu0 %v911
        %945 = vmatpush.msra.mxu0 %v910
        %946 = vmatmul.f32.gmra.mxu0 %v908
        %v947 = vpop.f32.mrf.mxu0
        %v948 = vadd.f32 %v928, %v947
        %949 = vmatmul.f32.gmra.mxu0 %v909
        %v950 = vpop.f32.mrf.mxu0
        %v951 = vadd.f32 %v928, %v950
        %952 = vdwg.mxu0
        %v953 = vmax.f32 %v948, 0.0
        %v954 = vmax.f32 %v951, 0.0
        %v955 = vld [vmem:[#allocation13] sm:$0xff]
        %v956 = vld [vmem:[#allocation13 + $0x8] sm:$0xff]
        %v957 = vld [vmem:[#allocation13 + $0x10] sm:$0xff]
        %v958 = vld [vmem:[#allocation13 + $0x18] sm:$0xff]
        %v959 = vld [vmem:[#allocation13 + $0x20] sm:$0xff]
        %v960 = vld [vmem:[#allocation13 + $0x28] sm:$0xff]
        %v961 = vld [vmem:[#allocation13 + $0x30] sm:$0xff]
        %v962 = vld [vmem:[#allocation13 + $0x38] sm:$0xff]
        %v963 = vld [vmem:[#allocation13 + $0x40] sm:$0xff]
        %v964 = vld [vmem:[#allocation13 + $0x48] sm:$0xff]
        %v965 = vld [vmem:[#allocation13 + $0x50] sm:$0xff]
        %v966 = vld [vmem:[#allocation13 + $0x58] sm:$0xff]
        %v967 = vld [vmem:[#allocation13 + $0x60] sm:$0xff]
        %v968 = vld [vmem:[#allocation13 + $0x68] sm:$0xff]
        %v969 = vld [vmem:[#allocation13 + $0x70] sm:$0xff]
        %v970 = vld [vmem:[#allocation13 + $0x78] sm:$0xff]
        %v971 = vld [vmem:[%s15] sm:$0x1]
        %v973 = vperm.slane %v971, 0
        %975 = vmatpush.msra.mxu0 %v970
        %976 = vmatpush.msra.mxu0 %v969
        %977 = vmatpush.msra.mxu0 %v968
        %978 = vmatpush.msra.mxu0 %v967
        %979 = vmatpush.msra.mxu0 %v966
        %980 = vmatpush.msra.mxu0 %v965
        %981 = vmatpush.msra.mxu0 %v964
        %982 = vmatpush.msra.mxu0 %v963
        %983 = vmatpush.msra.mxu0 %v962
        %984 = vmatpush.msra.mxu0 %v961
        %985 = vmatpush.msra.mxu0 %v960
        %986 = vmatpush.msra.mxu0 %v959
        %987 = vmatpush.msra.mxu0 %v958
        %988 = vmatpush.msra.mxu0 %v957
        %989 = vmatpush.msra.mxu0 %v956
        %990 = vmatpush.msra.mxu0 %v955
        %991 = vmatmul.f32.gmra.mxu0 %v953
        %v992 = vpop.f32.mrf.mxu0
        %v993 = vadd.f32 %v973, %v992
        %994 = vmatmul.f32.gmra.mxu0 %v954
        %v995 = vpop.f32.mrf.mxu0
        %v996 = vadd.f32 %v973, %v995
        %997 = vdwg.mxu0
        %998 = vst [vmem:[%s637] sm:$0xff] %v993
        %999 = vst [vmem:[%s637 + $0x8] sm:$0xff] %v996
        %s1000 = sand.u32 %s385, 1
        %s1001 = scalar_lea.sflag [#allocation4], %s1000
        %s1002 = sand.u32 %s385, 1
        %s1003 = smul.addr %s1002, 16
        %s1004 = scalar_lea.vmem [#allocation14], %s1003
        // Predicated region
        $region113: #{tpu_custom_call.1} parent=83 // pred_check
          %p1005 = pneg %p395
        $region114: #{tpu_custom_call.1} parent=83 // pred_check_branch
          %1007 = sbr.rel (%p1005) target = $region116
        $region115: #{tpu_custom_call.1} parent=83 // pred_region
          %1009 = vsyncadd %s1001, 0
          %s1010 = smul.addr %s36, 2
          %s1011 = smul.addr %s1010, 8
          %s1012 = scalar_lea.hbm %s16, %s1011
          %s1013 = sshll.u32 %s1004, 4
          %s1014 = int_to_ptr.vmem [resolvable:$true] %s1013
          %s1015 = sshll.u32 %s1012, 4
          %s1016 = int_to_ptr.hbm [resolvable:$true] %s1015
          %1021 = dma.vmem_to_hbm [thread:$0]  %s1014, 256, %s1016, %s1001, 128, 128, 8
        $region116: #{tpu_custom_call.1} parent=83 // pred_fallthru
          _
      $region84: #{tpu_custom_call.1} parent=5 // pred_fallthru
        _
      %p1022 = scmp.le.s32.totalorder 2, %s31
      // Predicated region
      $region117: #{tpu_custom_call.1} parent=5 // pred_check
        %p1023 = pneg %p1022
      $region118: #{tpu_custom_call.1} parent=5 // pred_check_branch
        %1025 = sbr.rel (%p1023) target = $region120
      $region119: #{tpu_custom_call.1} parent=5 // pred_region
        %s1026 = ssub.s32 %s31, 2
        // Predicated region
        $region121: #{tpu_custom_call.1} parent=119 // pred_check
          %p1027 = pneg %p401
        $region122: #{tpu_custom_call.1} parent=119 // pred_check_branch
          %1029 = sbr.rel (%p1027) target = $region124
        $region123: #{tpu_custom_call.1} parent=119 // pred_region
          %s1030 = sand.u32 %s386, 1
          %s1031 = scalar_lea.sflag [#allocation4], %s1030
          %s1032 = sand.u32 %s386, 1
          %s1033 = smul.addr %s1032, 16
          %s1034 = scalar_lea.vmem [#allocation14], %s1033
          %1036 = dma.done %s1031, 256
        $region124: #{tpu_custom_call.1} parent=119 // pred_fallthru
          _
      $region120: #{tpu_custom_call.1} parent=5 // pred_fallthru
        _
    $region6: #{tpu_custom_call.1} parent=1 // loop_footer
      %s35 = sadd.s32 1, %s31
    $region7: #{tpu_custom_call.1} parent=1 // loop_footer_branch
      %30 = sbr.rel target = $region3
    $region8: #{tpu_custom_call.1} parent=1 // loop_exit
      _
    %1037 = vsyncpa [#allocation3], 1
    %s1038 = scalar_lea.sflag [#allocation3], 1
    %1039 = vsyncpa %s1038, 1
    %1040 = vsyncpa [#allocation6], 1
    %s1041 = scalar_lea.sflag [#allocation6], 1
    %1042 = vsyncpa %s1041, 1
    %1043 = vsyncpa [#allocation9], 1
    %1044 = vsyncpa [#allocation12], 1
    %1045 = vsyncpa [#allocation4], 1
    %s1046 = scalar_lea.sflag [#allocation4], 1
    %1047 = vsyncpa %s1046, 1

</llo_original>
